<compile_context>
chip_gen: v5e
topology: v5e:2x2
jax: 0.10.0
libtpu: 0.0.40
codegen_flags: <defaults>
</compile_context>

<pallas_src>
import math

import jax
import jax.numpy as jnp
from jax import lax
from jax.experimental import pallas as pl
from jax.experimental.pallas import tpu as pltpu

D_MODEL = 64
D_HIDDEN = D_MODEL * 4  # 256
DROPOUT_P = 0.1         # unused at inference (identity)

TM = 512        # token-tile rows per grid step (few-hundred-KiB tiles; safe on 64 MiB v7x VMEM)
SUB_ROWS = 128  # inner sub-chunk: bounds the (SUB_ROWS, 256) f32 hidden live range


def ffn_kernel(x_ref, w1_ref, b1_ref, w2_ref, b2_ref, o_ref):
    # x_ref : (TM, D_MODEL)       bf16 token tile
    # w1_ref: (D_MODEL, D_HIDDEN) bf16  (already (in, out) = transpose of PyTorch (out, in))
    # b1_ref: (1, D_HIDDEN)       f32
    # w2_ref: (D_HIDDEN, D_MODEL) bf16
    # b2_ref: (1, D_MODEL)        f32
    # o_ref : (TM, D_MODEL)       f32
    w1 = w1_ref[...]
    w2 = w2_ref[...]
    b1 = b1_ref[...]
    b2 = b2_ref[...]

    def body(c, carry):
        r = pl.multiple_of(c * SUB_ROWS, SUB_ROWS)
        x = x_ref[pl.ds(r, SUB_ROWS), :]                           # bf16
        h = jnp.dot(x, w1, preferred_element_type=jnp.float32)     # MXU, f32 acc
        h = jnp.maximum(h + b1, 0.0)                               # f32 VPU bias + ReLU
        y = jnp.dot(h.astype(jnp.bfloat16), w2,
                    preferred_element_type=jnp.float32)            # MXU, f32 acc
        y = y + b2
        # Dropout: inference mode -> identity.
        o_ref[pl.ds(r, SUB_ROWS), :] = y.astype(o_ref.dtype)
        return carry

    lax.fori_loop(0, TM // SUB_ROWS, body, 0, unroll=True)


def feedforward_network(x, w1, b1, w2, b2):
    """x: (B, T, D_MODEL) float32 -> (B, T, D_MODEL) float32 (eval-mode FFN)."""
    B, T, D = x.shape
    assert D == D_MODEL
    M = B * T
    M_pad = pl.cdiv(M, TM) * TM

    # Cast matmul operands once in the wrapper; biases stay f32.
    x2d = x.reshape(M, D).astype(jnp.bfloat16)
    if M_pad != M:
        x2d = jnp.pad(x2d, ((0, M_pad - M), (0, 0)))
    w1_bf = w1.astype(jnp.bfloat16)
    w2_bf = w2.astype(jnp.bfloat16)
    b1_2d = b1.reshape(1, D_HIDDEN).astype(jnp.float32)
    b2_2d = b2.reshape(1, D_MODEL).astype(jnp.float32)

    out2d = pl.pallas_call(
        ffn_kernel,
        out_shape=jax.ShapeDtypeStruct((M_pad, D_MODEL), jnp.float32),
        grid=(M_pad // TM,),
        in_specs=[
            pl.BlockSpec((TM, D_MODEL), lambda i: (i, 0)),          # x tile, pipelined
            pl.BlockSpec((D_MODEL, D_HIDDEN), lambda i: (0, 0)),    # w1, VMEM-resident
            pl.BlockSpec((1, D_HIDDEN), lambda i: (0, 0)),          # b1
            pl.BlockSpec((D_HIDDEN, D_MODEL), lambda i: (0, 0)),    # w2
            pl.BlockSpec((1, D_MODEL), lambda i: (0, 0)),           # b2
        ],
        out_specs=pl.BlockSpec((TM, D_MODEL), lambda i: (i, 0)),
        compiler_params=pltpu.CompilerParams(
            dimension_semantics=("parallel",)),                      # megacore on v7x
    )(x2d, w1_bf, b1_2d, w2_bf, b2_2d)

    return out2d[:M].reshape(B, T, D_MODEL)


def init_params(key):
    """Deterministic init mimicking nn.Linear's U(-1/sqrt(fan_in), 1/sqrt(fan_in))."""
    k1, k2, k3, k4 = jax.random.split(key, 4)
    bound1 = 1.0 / math.sqrt(D_MODEL)
    bound2 = 1.0 / math.sqrt(D_HIDDEN)
    # Stored directly in (in, out) layout == transpose of PyTorch's (out, in).
    w1 = jax.random.uniform(k1, (D_MODEL, D_HIDDEN), jnp.float32,
                            minval=-bound1, maxval=bound1)
    b1 = jax.random.uniform(k2, (D_HIDDEN,), jnp.float32,
                            minval=-bound1, maxval=bound1)
    w2 = jax.random.uniform(k3, (D_HIDDEN, D_MODEL), jnp.float32,
                            minval=-bound2, maxval=bound2)
    b2 = jax.random.uniform(k4, (D_MODEL,), jnp.float32,
                            minval=-bound2, maxval=bound2)
    return w1, b1, w2, b2


if __name__ == "__main__":
    key = jax.random.PRNGKey(0)
    kx, kp = jax.random.split(key)

    B, T = 2, 8  # small batch / sequence
    x = jax.random.normal(kx, (B, T, D_MODEL), dtype=jnp.float32)
    w1, b1, w2, b2 = init_params(kp)

    out = feedforward_network(x, w1, b1, w2, b2)
    out = jax.block_until_ready(out)

    # Reference in plain f32 JAX (eval-mode dropout == identity); loose tolerance
    # because the kernel's matmul operands are bf16 (f32 accumulation).
    ref = jnp.maximum(x.reshape(-1, D_MODEL) @ w1 + b1, 0.0) @ w2 + b2
    ref = ref.reshape(B, T, D_MODEL)
    assert out.shape == (B, T, D_MODEL)
    assert jnp.allclose(out, ref, atol=2e-2, rtol=2e-2), \
        float(jnp.max(jnp.abs(out - ref)))

    print("KERNEL_OK")
</pallas_src>

<mosaic_0001>
module attributes {stable_mosaic.version = 11 : i64} {
  func.func @ffn_kernel(%arg0: i32, %arg1: memref<512x64xbf16, #tpu.memory_space<vmem>>, %arg2: memref<64x256xbf16, #tpu.memory_space<vmem>>, %arg3: memref<1x256xf32, #tpu.memory_space<vmem>>, %arg4: memref<256x64xbf16, #tpu.memory_space<vmem>>, %arg5: memref<1x64xf32, #tpu.memory_space<vmem>>, %arg6: memref<512x64xf32, #tpu.memory_space<vmem>>) attributes {dimension_semantics = [#tpu.dimension_semantics<parallel>], iteration_bounds = array<i64: 1>, scalar_prefetch = 0 : i64, scratch_operands = 0 : i64, tpu.core_type = #tpu.core_type<tc>, window_params = [{transform_indices = @transform_0, window_bounds = array<i64: 512, 64>}, {pipeline_mode = #tpu.pipeline_mode<synchronous>, transform_indices = @transform_1, window_bounds = array<i64: 64, 256>}, {pipeline_mode = #tpu.pipeline_mode<synchronous>, transform_indices = @transform_2, window_bounds = array<i64: 1, 256>}, {pipeline_mode = #tpu.pipeline_mode<synchronous>, transform_indices = @transform_3, window_bounds = array<i64: 256, 64>}, {pipeline_mode = #tpu.pipeline_mode<synchronous>, transform_indices = @transform_4, window_bounds = array<i64: 1, 64>}, {transform_indices = @transform_5, window_bounds = array<i64: 512, 64>}]} {
    %c0 = arith.constant 0 : index
    %c0_0 = arith.constant 0 : index
    %0 = vector.load %arg2[%c0, %c0_0] : memref<64x256xbf16, #tpu.memory_space<vmem>>, vector<64x256xbf16>
    %c0_1 = arith.constant 0 : index
    %c0_2 = arith.constant 0 : index
    %1 = vector.load %arg4[%c0_1, %c0_2] : memref<256x64xbf16, #tpu.memory_space<vmem>>, vector<256x64xbf16>
    %c0_3 = arith.constant 0 : index
    %c0_4 = arith.constant 0 : index
    %2 = vector.load %arg3[%c0_3, %c0_4] : memref<1x256xf32, #tpu.memory_space<vmem>>, vector<1x256xf32>
    %c0_5 = arith.constant 0 : index
    %c0_6 = arith.constant 0 : index
    %3 = vector.load %arg5[%c0_5, %c0_6] : memref<1x64xf32, #tpu.memory_space<vmem>>, vector<1x64xf32>
    %c0_i32 = arith.constant 0 : i32
    %c128_i32 = arith.constant 128 : i32
    %4 = arith.muli %c0_i32, %c128_i32 : i32
    %5 = tpu.assume_multiple %4, 128 : i32
    %6 = arith.index_cast %5 : i32 to index
    %c0_7 = arith.constant 0 : index
    %7 = vector.load %arg1[%6, %c0_7] : memref<512x64xbf16, #tpu.memory_space<vmem>>, vector<128x64xbf16>
    %cst = arith.constant dense<0.000000e+00> : vector<128x256xf32>
    %8 = tpu.matmul %7, %0, %cst {dimension_numbers = #tpu.dot_dimension_numbers<[1], [0], [0], [1], [0, 0, 1, 1], [], []>} : vector<128x64xbf16>, vector<64x256xbf16>, vector<128x256xf32> -> vector<128x256xf32>
    %9 = vector.broadcast %2 : vector<1x256xf32> to vector<128x256xf32>
    %10 = arith.addf %8, %9 : vector<128x256xf32>
    %cst_8 = arith.constant 0.000000e+00 : f32
    %11 = vector.broadcast %cst_8 : f32 to vector<128x256xf32>
    %12 = arith.maximumf %10, %11 : vector<128x256xf32>
    %13 = arith.truncf %12 : vector<128x256xf32> to vector<128x256xbf16>
    %cst_9 = arith.constant dense<0.000000e+00> : vector<128x64xf32>
    %14 = tpu.matmul %13, %1, %cst_9 {dimension_numbers = #tpu.dot_dimension_numbers<[1], [0], [0], [1], [0, 0, 1, 1], [], []>} : vector<128x256xbf16>, vector<256x64xbf16>, vector<128x64xf32> -> vector<128x64xf32>
    %15 = vector.broadcast %3 : vector<1x64xf32> to vector<128x64xf32>
    %16 = arith.addf %14, %15 : vector<128x64xf32>
    %17 = arith.index_cast %5 : i32 to index
    %c0_10 = arith.constant 0 : index
    %18 = vector.load %arg6[%17, %c0_10] : memref<512x64xf32, #tpu.memory_space<vmem>>, vector<128x64xf32>
    tpu.vector_store %arg6[%17, %c0_10], %16 {strides = array<i32>} : memref<512x64xf32, #tpu.memory_space<vmem>>, vector<128x64xf32>,
    %c1_i32 = arith.constant 1 : i32
    %c128_i32_11 = arith.constant 128 : i32
    %19 = arith.muli %c1_i32, %c128_i32_11 : i32
    %20 = tpu.assume_multiple %19, 128 : i32
    %21 = arith.index_cast %20 : i32 to index
    %c0_12 = arith.constant 0 : index
    %22 = vector.load %arg1[%21, %c0_12] : memref<512x64xbf16, #tpu.memory_space<vmem>>, vector<128x64xbf16>
    %cst_13 = arith.constant dense<0.000000e+00> : vector<128x256xf32>
    %23 = tpu.matmul %22, %0, %cst_13 {dimension_numbers = #tpu.dot_dimension_numbers<[1], [0], [0], [1], [0, 0, 1, 1], [], []>} : vector<128x64xbf16>, vector<64x256xbf16>, vector<128x256xf32> -> vector<128x256xf32>
    %24 = vector.broadcast %2 : vector<1x256xf32> to vector<128x256xf32>
    %25 = arith.addf %23, %24 : vector<128x256xf32>
    %cst_14 = arith.constant 0.000000e+00 : f32
    %26 = vector.broadcast %cst_14 : f32 to vector<128x256xf32>
    %27 = arith.maximumf %25, %26 : vector<128x256xf32>
    %28 = arith.truncf %27 : vector<128x256xf32> to vector<128x256xbf16>
    %cst_15 = arith.constant dense<0.000000e+00> : vector<128x64xf32>
    %29 = tpu.matmul %28, %1, %cst_15 {dimension_numbers = #tpu.dot_dimension_numbers<[1], [0], [0], [1], [0, 0, 1, 1], [], []>} : vector<128x256xbf16>, vector<256x64xbf16>, vector<128x64xf32> -> vector<128x64xf32>
    %30 = vector.broadcast %3 : vector<1x64xf32> to vector<128x64xf32>
    %31 = arith.addf %29, %30 : vector<128x64xf32>
    %32 = arith.index_cast %20 : i32 to index
    %c0_16 = arith.constant 0 : index
    %33 = vector.load %arg6[%32, %c0_16] : memref<512x64xf32, #tpu.memory_space<vmem>>, vector<128x64xf32>
    tpu.vector_store %arg6[%32, %c0_16], %31 {strides = array<i32>} : memref<512x64xf32, #tpu.memory_space<vmem>>, vector<128x64xf32>,
    %c2_i32 = arith.constant 2 : i32
    %c128_i32_17 = arith.constant 128 : i32
    %34 = arith.muli %c2_i32, %c128_i32_17 : i32
    %35 = tpu.assume_multiple %34, 128 : i32
    %36 = arith.index_cast %35 : i32 to index
    %c0_18 = arith.constant 0 : index
    %37 = vector.load %arg1[%36, %c0_18] : memref<512x64xbf16, #tpu.memory_space<vmem>>, vector<128x64xbf16>
    %cst_19 = arith.constant dense<0.000000e+00> : vector<128x256xf32>
    %38 = tpu.matmul %37, %0, %cst_19 {dimension_numbers = #tpu.dot_dimension_numbers<[1], [0], [0], [1], [0, 0, 1, 1], [], []>} : vector<128x64xbf16>, vector<64x256xbf16>, vector<128x256xf32> -> vector<128x256xf32>
    %39 = vector.broadcast %2 : vector<1x256xf32> to vector<128x256xf32>
    %40 = arith.addf %38, %39 : vector<128x256xf32>
    %cst_20 = arith.constant 0.000000e+00 : f32
    %41 = vector.broadcast %cst_20 : f32 to vector<128x256xf32>
    %42 = arith.maximumf %40, %41 : vector<128x256xf32>
    %43 = arith.truncf %42 : vector<128x256xf32> to vector<128x256xbf16>
    %cst_21 = arith.constant dense<0.000000e+00> : vector<128x64xf32>
    %44 = tpu.matmul %43, %1, %cst_21 {dimension_numbers = #tpu.dot_dimension_numbers<[1], [0], [0], [1], [0, 0, 1, 1], [], []>} : vector<128x256xbf16>, vector<256x64xbf16>, vector<128x64xf32> -> vector<128x64xf32>
    %45 = vector.broadcast %3 : vector<1x64xf32> to vector<128x64xf32>
    %46 = arith.addf %44, %45 : vector<128x64xf32>
    %47 = arith.index_cast %35 : i32 to index
    %c0_22 = arith.constant 0 : index
    %48 = vector.load %arg6[%47, %c0_22] : memref<512x64xf32, #tpu.memory_space<vmem>>, vector<128x64xf32>
    tpu.vector_store %arg6[%47, %c0_22], %46 {strides = array<i32>} : memref<512x64xf32, #tpu.memory_space<vmem>>, vector<128x64xf32>,
    %c3_i32 = arith.constant 3 : i32
    %c128_i32_23 = arith.constant 128 : i32
    %49 = arith.muli %c3_i32, %c128_i32_23 : i32
    %50 = tpu.assume_multiple %49, 128 : i32
    %51 = arith.index_cast %50 : i32 to index
    %c0_24 = arith.constant 0 : index
    %52 = vector.load %arg1[%51, %c0_24] : memref<512x64xbf16, #tpu.memory_space<vmem>>, vector<128x64xbf16>
    %cst_25 = arith.constant dense<0.000000e+00> : vector<128x256xf32>
    %53 = tpu.matmul %52, %0, %cst_25 {dimension_numbers = #tpu.dot_dimension_numbers<[1], [0], [0], [1], [0, 0, 1, 1], [], []>} : vector<128x64xbf16>, vector<64x256xbf16>, vector<128x256xf32> -> vector<128x256xf32>
    %54 = vector.broadcast %2 : vector<1x256xf32> to vector<128x256xf32>
    %55 = arith.addf %53, %54 : vector<128x256xf32>
    %cst_26 = arith.constant 0.000000e+00 : f32
    %56 = vector.broadcast %cst_26 : f32 to vector<128x256xf32>
    %57 = arith.maximumf %55, %56 : vector<128x256xf32>
    %58 = arith.truncf %57 : vector<128x256xf32> to vector<128x256xbf16>
    %cst_27 = arith.constant dense<0.000000e+00> : vector<128x64xf32>
    %59 = tpu.matmul %58, %1, %cst_27 {dimension_numbers = #tpu.dot_dimension_numbers<[1], [0], [0], [1], [0, 0, 1, 1], [], []>} : vector<128x256xbf16>, vector<256x64xbf16>, vector<128x64xf32> -> vector<128x64xf32>
    %60 = vector.broadcast %3 : vector<1x64xf32> to vector<128x64xf32>
    %61 = arith.addf %59, %60 : vector<128x64xf32>
    %62 = arith.index_cast %50 : i32 to index
    %c0_28 = arith.constant 0 : index
    %63 = vector.load %arg6[%62, %c0_28] : memref<512x64xf32, #tpu.memory_space<vmem>>, vector<128x64xf32>
    tpu.vector_store %arg6[%62, %c0_28], %61 {strides = array<i32>} : memref<512x64xf32, #tpu.memory_space<vmem>>, vector<128x64xf32>,
    %c4_i32 = arith.constant 4 : i32
    return
  }
  func.func @transform_0(%arg0: i32) -> (i32, i32) {
    %c0_i32 = arith.constant 0 : i32
    %c0_i32_0 = arith.constant 0 : i32
    return %arg0, %c0_i32 : i32, i32
  }
  func.func @transform_1(%arg0: i32) -> (i32, i32) {
    %c0_i32 = arith.constant 0 : i32
    %c0_i32_0 = arith.constant 0 : i32
    %c0_i32_1 = arith.constant 0 : i32
    return %c0_i32, %c0_i32_0 : i32, i32
  }
  func.func @transform_2(%arg0: i32) -> (i32, i32) {
    %c0_i32 = arith.constant 0 : i32
    %c0_i32_0 = arith.constant 0 : i32
    %c0_i32_1 = arith.constant 0 : i32
    return %c0_i32, %c0_i32_0 : i32, i32
  }
  func.func @transform_3(%arg0: i32) -> (i32, i32) {
    %c0_i32 = arith.constant 0 : i32
    %c0_i32_0 = arith.constant 0 : i32
    %c0_i32_1 = arith.constant 0 : i32
    return %c0_i32, %c0_i32_0 : i32, i32
  }
  func.func @transform_4(%arg0: i32) -> (i32, i32) {
    %c0_i32 = arith.constant 0 : i32
    %c0_i32_0 = arith.constant 0 : i32
    %c0_i32_1 = arith.constant 0 : i32
    return %c0_i32, %c0_i32_0 : i32, i32
  }
  func.func @transform_5(%arg0: i32) -> (i32, i32) {
    %c0_i32 = arith.constant 0 : i32
    %c0_i32_0 = arith.constant 0 : i32
    return %arg0, %c0_i32 : i32, i32
  }
}

</mosaic_0001>

<llo_original>
// kernel: tpu_custom_call.1
$region0: #{tpu_custom_call.1}
  #allocation0 [shape = 'u32[]', space=smem, size = 0x4, offset = 0x4, fixed_abs, tag = 'smem constant byte address 0x4 - core index']
  #allocation1 [shape = 'u32[72,128]{1,0:T(1,128)}', space=vmem, size = 0x9000, scoped, tag = 'internal scratch']
  %s0 = inlined_call_operand.vmem [shape: bf16[512,64], index: 0, kind: input, shape index: {}]
  %s1 = inlined_call_operand.vmem [shape: bf16[64,256], index: 1, kind: input, shape index: {}]
  %s2 = inlined_call_operand.vmem [shape: f32[1,256], index: 2, kind: input, shape index: {}]
  %s3 = inlined_call_operand.vmem [shape: bf16[256,64], index: 3, kind: input, shape index: {}]
  %s4 = inlined_call_operand.vmem [shape: f32[1,64], index: 4, kind: input, shape index: {}]
  %s5 = inlined_call_operand.vmem [shape: f32[512,64], index: 5, kind: output, shape index: {}]
  %s6 = sld [smem:[#allocation0]]
  $region30: #{tpu_custom_call.1} parent=0
    _
  %s8 = ssub.s32 1, %s6
  %s9 = scalar_select 0, %s8, %s6
  // Predicated region
  $region2: #{tpu_custom_call.1} parent=0 // pred_check
    _
  $region3: #{tpu_custom_call.1} parent=0 // pred_check_branch
    %11 = sbr.rel (0) target = $region5
  $region4: #{tpu_custom_call.1} parent=0 // pred_region
    _
  $region5: #{tpu_custom_call.1} parent=0 // pred_fallthru
    _
  // Predicated region
  $region6: #{tpu_custom_call.1} parent=0 // pred_check
    _
  $region7: #{tpu_custom_call.1} parent=0 // pred_check_branch
    %13 = sbr.rel (0) target = $region9
  $region8: #{tpu_custom_call.1} parent=0 // pred_region
    _
  $region9: #{tpu_custom_call.1} parent=0 // pred_fallthru
    _
  // Predicated region
  $region10: #{tpu_custom_call.1} parent=0 // pred_check
    _
  $region11: #{tpu_custom_call.1} parent=0 // pred_check_branch
    %15 = sbr.rel (0) target = $region13
  $region12: #{tpu_custom_call.1} parent=0 // pred_region
    _
  $region13: #{tpu_custom_call.1} parent=0 // pred_fallthru
    _
  // Predicated region
  $region14: #{tpu_custom_call.1} parent=0 // pred_check
    _
  $region15: #{tpu_custom_call.1} parent=0 // pred_check_branch
    %17 = sbr.rel (0) target = $region17
  $region16: #{tpu_custom_call.1} parent=0 // pred_region
    _
  $region17: #{tpu_custom_call.1} parent=0 // pred_fallthru
    _
  // Predicated region
  $region18: #{tpu_custom_call.1} parent=0 // pred_check
    _
  $region19: #{tpu_custom_call.1} parent=0 // pred_check_branch
    %19 = sbr.rel (0) target = $region21
  $region20: #{tpu_custom_call.1} parent=0 // pred_region
    _
  $region21: #{tpu_custom_call.1} parent=0 // pred_fallthru
    _
  %v21 = vld [vmem:[%s1] sm:$0xff]
  %v22 = vld [vmem:[%s1 + $0x8] sm:$0xff]
  %v23 = vld [vmem:[%s1 + $0x10] sm:$0xff]
  %v24 = vld [vmem:[%s1 + $0x18] sm:$0xff]
  %v25 = vld [vmem:[%s1 + $0x20] sm:$0xff]
  %v26 = vld [vmem:[%s1 + $0x28] sm:$0xff]
  %v27 = vld [vmem:[%s1 + $0x30] sm:$0xff]
  %v28 = vld [vmem:[%s1 + $0x38] sm:$0xff]
  %v29 = vld [vmem:[%s3] sm:$0xf]
  %v30 = vld [vmem:[%s3 + $0x4] sm:$0xf]
  %v31 = vld [vmem:[%s3 + $0x8] sm:$0xf]
  %v32 = vld [vmem:[%s3 + $0xc] sm:$0xf]
  %v33 = vld [vmem:[%s3 + $0x10] sm:$0xf]
  %v34 = vld [vmem:[%s3 + $0x14] sm:$0xf]
  %v35 = vld [vmem:[%s3 + $0x18] sm:$0xf]
  %v36 = vld [vmem:[%s3 + $0x1c] sm:$0xf]
  %v37 = vld [vmem:[%s3 + $0x20] sm:$0xf]
  %v38 = vld [vmem:[%s3 + $0x24] sm:$0xf]
  %v39 = vld [vmem:[%s3 + $0x28] sm:$0xf]
  %v40 = vld [vmem:[%s3 + $0x2c] sm:$0xf]
  %v41 = vld [vmem:[%s3 + $0x30] sm:$0xf]
  %v42 = vld [vmem:[%s3 + $0x34] sm:$0xf]
  %v43 = vld [vmem:[%s3 + $0x38] sm:$0xf]
  %v44 = vld [vmem:[%s3 + $0x3c] sm:$0xf]
  %v45 = vld [vmem:[%s3 + $0x40] sm:$0xf]
  %v46 = vld [vmem:[%s3 + $0x44] sm:$0xf]
  %v47 = vld [vmem:[%s3 + $0x48] sm:$0xf]
  %v48 = vld [vmem:[%s3 + $0x4c] sm:$0xf]
  %v49 = vld [vmem:[%s3 + $0x50] sm:$0xf]
  %v50 = vld [vmem:[%s3 + $0x54] sm:$0xf]
  %v51 = vld [vmem:[%s3 + $0x58] sm:$0xf]
  %v52 = vld [vmem:[%s3 + $0x5c] sm:$0xf]
  %v53 = vld [vmem:[%s3 + $0x60] sm:$0xf]
  %v54 = vld [vmem:[%s3 + $0x64] sm:$0xf]
  %v55 = vld [vmem:[%s3 + $0x68] sm:$0xf]
  %v56 = vld [vmem:[%s3 + $0x6c] sm:$0xf]
  %v57 = vld [vmem:[%s3 + $0x70] sm:$0xf]
  %v58 = vld [vmem:[%s3 + $0x74] sm:$0xf]
  %v59 = vld [vmem:[%s3 + $0x78] sm:$0xf]
  %v60 = vld [vmem:[%s3 + $0x7c] sm:$0xf]
  %v61 = vld [vmem:[%s2] sm:$0x3]
  %v62 = vld [vmem:[%s4] sm:$0x1]
  %v63 = vld [vmem:[%s0] sm:$0xf]
  %v64 = vld [vmem:[%s0 + $0x4] sm:$0xf]
  %v65 = vld [vmem:[%s0 + $0x8] sm:$0xf]
  %v66 = vld [vmem:[%s0 + $0xc] sm:$0xf]
  %v67 = vld [vmem:[%s0 + $0x10] sm:$0xf]
  %v68 = vld [vmem:[%s0 + $0x14] sm:$0xf]
  %v69 = vld [vmem:[%s0 + $0x18] sm:$0xf]
  %v70 = vld [vmem:[%s0 + $0x1c] sm:$0xf]
  %v71 = vld [vmem:[%s0 + $0x20] sm:$0xf]
  %v72 = vld [vmem:[%s0 + $0x24] sm:$0xf]
  %v73 = vld [vmem:[%s0 + $0x28] sm:$0xf]
  %v74 = vld [vmem:[%s0 + $0x2c] sm:$0xf]
  %v75 = vld [vmem:[%s0 + $0x30] sm:$0xf]
  %v76 = vld [vmem:[%s0 + $0x34] sm:$0xf]
  %v77 = vld [vmem:[%s0 + $0x38] sm:$0xf]
  %v78 = vld [vmem:[%s0 + $0x3c] sm:$0xf]
  %v80 = vperm.slane %v61, 0
  %v81 = vperm.slane %v61, 1
  %v100 = vunpack.c.l.b16 %v63
  %v101 = vunpack.c.l.b16 %v64
  %v102 = vunpack.c.l.b16 %v65
  %v103 = vunpack.c.l.b16 %v66
  %v104 = vunpack.c.l.b16 %v67
  %v105 = vunpack.c.l.b16 %v68
  %v106 = vunpack.c.l.b16 %v69
  %v107 = vunpack.c.l.b16 %v70
  %v108 = vunpack.c.l.b16 %v71
  %v109 = vunpack.c.l.b16 %v72
  %v110 = vunpack.c.l.b16 %v73
  %v111 = vunpack.c.l.b16 %v74
  %v112 = vunpack.c.l.b16 %v75
  %v113 = vunpack.c.l.b16 %v76
  %v114 = vunpack.c.l.b16 %v77
  %v115 = vunpack.c.l.b16 %v78
  %v116 = vpack.c.b16 %v101, %v100
  %v117 = vpack.c.b16 %v103, %v102
  %v118 = vpack.c.b16 %v105, %v104
  %v119 = vpack.c.b16 %v107, %v106
  %v120 = vpack.c.b16 %v109, %v108
  %v121 = vpack.c.b16 %v111, %v110
  %v122 = vpack.c.b16 %v113, %v112
  %v123 = vpack.c.b16 %v115, %v114
  %v132 = vunpack.c.l.b16 %v21
  %v133 = vunpack.c.h.b16 %v21
  %v134 = vunpack.c.l.b16 %v22
  %v135 = vunpack.c.h.b16 %v22
  %v136 = vunpack.c.l.b16 %v23
  %v137 = vunpack.c.h.b16 %v23
  %v138 = vunpack.c.l.b16 %v24
  %v139 = vunpack.c.h.b16 %v24
  %v140 = vunpack.c.l.b16 %v25
  %v141 = vunpack.c.h.b16 %v25
  %v142 = vunpack.c.l.b16 %v26
  %v143 = vunpack.c.h.b16 %v26
  %v144 = vunpack.c.l.b16 %v27
  %v145 = vunpack.c.h.b16 %v27
  %v146 = vunpack.c.l.b16 %v28
  %v147 = vunpack.c.h.b16 %v28
  %v148 = vpack.c.b16 %v134, %v132
  %v149 = vpack.c.b16 %v135, %v133
  %v150 = vpack.c.b16 %v138, %v136
  %v151 = vpack.c.b16 %v139, %v137
  %v152 = vpack.c.b16 %v142, %v140
  %v153 = vpack.c.b16 %v143, %v141
  %v154 = vpack.c.b16 %v146, %v144
  %v155 = vpack.c.b16 %v147, %v145
  %vm164 = vcmask 523264
  %v166 = vsel %vm164, %v116, 0
  %v169 = vsel %vm164, %v117, 0
  %v172 = vsel %vm164, %v118, 0
  %v175 = vsel %vm164, %v119, 0
  %v178 = vsel %vm164, %v120, 0
  %v181 = vsel %vm164, %v121, 0
  %v184 = vsel %vm164, %v122, 0
  %v187 = vsel %vm164, %v123, 0
  %189 = vmatpush.bf16.msra.mxu0 0
  %190 = vmatpush.bf16.msra.mxu0 0
  %191 = vmatpush.bf16.msra.mxu0 0
  %192 = vmatpush.bf16.msra.mxu0 0
  %193 = vmatpush.bf16.msra.mxu0 %v154
  %194 = vmatpush.bf16.msra.mxu0 %v152
  %195 = vmatpush.bf16.msra.mxu0 %v150
  %196 = vmatpush.bf16.msra.mxu0 %v148
  %197 = vmatmul.bf16.gmra.mxu0 %v166
  %v198 = vpop.f32.mrf.mxu0
  %v199 = vadd.f32 %v80, %v198
  %v200 = vpop.f32.mrf.mxu0
  %v201 = vadd.f32 %v80, %v200
  %202 = vmatmul.bf16.gmra.mxu0 %v169
  %v203 = vpop.f32.mrf.mxu0
  %v204 = vadd.f32 %v80, %v203
  %v205 = vpop.f32.mrf.mxu0
  %v206 = vadd.f32 %v80, %v205
  %207 = vmatmul.bf16.gmra.mxu0 %v172
  %v208 = vpop.f32.mrf.mxu0
  %v209 = vadd.f32 %v80, %v208
  %v210 = vpop.f32.mrf.mxu0
  %v211 = vadd.f32 %v80, %v210
  %212 = vmatmul.bf16.gmra.mxu0 %v175
  %v213 = vpop.f32.mrf.mxu0
  %v214 = vadd.f32 %v80, %v213
  %v215 = vpop.f32.mrf.mxu0
  %v216 = vadd.f32 %v80, %v215
  %217 = vmatmul.bf16.gmra.mxu0 %v178
  %v218 = vpop.f32.mrf.mxu0
  %v219 = vadd.f32 %v80, %v218
  %v220 = vpop.f32.mrf.mxu0
  %v221 = vadd.f32 %v80, %v220
  %222 = vmatmul.bf16.gmra.mxu0 %v181
  %v223 = vpop.f32.mrf.mxu0
  %v224 = vadd.f32 %v80, %v223
  %v225 = vpop.f32.mrf.mxu0
  %v226 = vadd.f32 %v80, %v225
  %227 = vmatmul.bf16.gmra.mxu0 %v184
  %v228 = vpop.f32.mrf.mxu0
  %v229 = vadd.f32 %v80, %v228
  %v230 = vpop.f32.mrf.mxu0
  %v231 = vadd.f32 %v80, %v230
  %232 = vmatmul.bf16.gmra.mxu0 %v187
  %v233 = vpop.f32.mrf.mxu0
  %v234 = vadd.f32 %v80, %v233
  %v235 = vpop.f32.mrf.mxu0
  %v236 = vadd.f32 %v80, %v235
  %237 = vdwg.mxu0
  %238 = vmatpush.bf16.msra.mxu0 0
  %239 = vmatpush.bf16.msra.mxu0 0
  %240 = vmatpush.bf16.msra.mxu0 0
  %241 = vmatpush.bf16.msra.mxu0 0
  %242 = vmatpush.bf16.msra.mxu0 %v155
  %243 = vmatpush.bf16.msra.mxu0 %v153
  %244 = vmatpush.bf16.msra.mxu0 %v151
  %245 = vmatpush.bf16.msra.mxu0 %v149
  %246 = vmatmul.bf16.gmra.mxu0 %v166
  %v247 = vpop.f32.mrf.mxu0
  %v248 = vadd.f32 %v81, %v247
  %v249 = vpop.f32.mrf.mxu0
  %v250 = vadd.f32 %v81, %v249
  %251 = vmatmul.bf16.gmra.mxu0 %v169
  %v252 = vpop.f32.mrf.mxu0
  %v253 = vadd.f32 %v81, %v252
  %v254 = vpop.f32.mrf.mxu0
  %v255 = vadd.f32 %v81, %v254
  %256 = vmatmul.bf16.gmra.mxu0 %v172
  %v257 = vpop.f32.mrf.mxu0
  %v258 = vadd.f32 %v81, %v257
  %v259 = vpop.f32.mrf.mxu0
  %v260 = vadd.f32 %v81, %v259
  %261 = vmatmul.bf16.gmra.mxu0 %v175
  %v262 = vpop.f32.mrf.mxu0
  %v263 = vadd.f32 %v81, %v262
  %v264 = vpop.f32.mrf.mxu0
  %v265 = vadd.f32 %v81, %v264
  %266 = vmatmul.bf16.gmra.mxu0 %v178
  %v267 = vpop.f32.mrf.mxu0
  %v268 = vadd.f32 %v81, %v267
  %v269 = vpop.f32.mrf.mxu0
  %v270 = vadd.f32 %v81, %v269
  %271 = vmatmul.bf16.gmra.mxu0 %v181
  %v272 = vpop.f32.mrf.mxu0
  %v273 = vadd.f32 %v81, %v272
  %v274 = vpop.f32.mrf.mxu0
  %v275 = vadd.f32 %v81, %v274
  %276 = vmatmul.bf16.gmra.mxu0 %v184
  %v277 = vpop.f32.mrf.mxu0
  %v278 = vadd.f32 %v81, %v277
  %v279 = vpop.f32.mrf.mxu0
  %v280 = vadd.f32 %v81, %v279
  %281 = vmatmul.bf16.gmra.mxu0 %v187
  %v282 = vpop.f32.mrf.mxu0
  %v283 = vadd.f32 %v81, %v282
  %v284 = vpop.f32.mrf.mxu0
  %v285 = vadd.f32 %v81, %v284
  %286 = vdwg.mxu0
  %v287 = vmax.f32 %v199, 0.0
  %v288 = vmax.f32 %v248, 0.0
  %v289 = vmax.f32 %v201, 0.0
  %v290 = vmax.f32 %v250, 0.0
  %v291 = vmax.f32 %v204, 0.0
  %v292 = vmax.f32 %v253, 0.0
  %v293 = vmax.f32 %v206, 0.0
  %v294 = vmax.f32 %v255, 0.0
  %v295 = vmax.f32 %v209, 0.0
  %v296 = vmax.f32 %v258, 0.0
  %v297 = vmax.f32 %v211, 0.0
  %v298 = vmax.f32 %v260, 0.0
  %v299 = vmax.f32 %v214, 0.0
  %v300 = vmax.f32 %v263, 0.0
  %v301 = vmax.f32 %v216, 0.0
  %v302 = vmax.f32 %v265, 0.0
  %v303 = vmax.f32 %v219, 0.0
  %v304 = vmax.f32 %v268, 0.0
  %v305 = vmax.f32 %v221, 0.0
  %v306 = vmax.f32 %v270, 0.0
  %v307 = vmax.f32 %v224, 0.0
  %v308 = vmax.f32 %v273, 0.0
  %v309 = vmax.f32 %v226, 0.0
  %v310 = vmax.f32 %v275, 0.0
  %v311 = vmax.f32 %v229, 0.0
  %v312 = vmax.f32 %v278, 0.0
  %v313 = vmax.f32 %v231, 0.0
  %v314 = vmax.f32 %v280, 0.0
  %v315 = vmax.f32 %v234, 0.0
  %v316 = vmax.f32 %v283, 0.0
  %v317 = vmax.f32 %v236, 0.0
  %v318 = vmax.f32 %v285, 0.0
  %v319 = vpack.c.bf16 %v289, %v287
  %v320 = vpack.c.bf16 %v290, %v288
  %v321 = vpack.c.bf16 %v293, %v291
  %v322 = vpack.c.bf16 %v294, %v292
  %v323 = vpack.c.bf16 %v297, %v295
  %v324 = vpack.c.bf16 %v298, %v296
  %v325 = vpack.c.bf16 %v301, %v299
  %v326 = vpack.c.bf16 %v302, %v300
  %v327 = vpack.c.bf16 %v305, %v303
  %v328 = vpack.c.bf16 %v306, %v304
  %v329 = vpack.c.bf16 %v309, %v307
  %v330 = vpack.c.bf16 %v310, %v308
  %v331 = vpack.c.bf16 %v313, %v311
  %v332 = vpack.c.bf16 %v314, %v312
  %v333 = vpack.c.bf16 %v317, %v315
  %v334 = vpack.c.bf16 %v318, %v316
  %v336 = vperm.slane %v62, 0
  %v370 = vunpack.c.l.b16 %v29
  %v371 = vunpack.c.l.b16 %v30
  %v372 = vunpack.c.l.b16 %v31
  %v373 = vunpack.c.l.b16 %v32
  %v374 = vunpack.c.l.b16 %v33
  %v375 = vunpack.c.l.b16 %v34
  %v376 = vunpack.c.l.b16 %v35
  %v377 = vunpack.c.l.b16 %v36
  %v378 = vunpack.c.l.b16 %v37
  %v379 = vunpack.c.l.b16 %v38
  %v380 = vunpack.c.l.b16 %v39
  %v381 = vunpack.c.l.b16 %v40
  %v382 = vunpack.c.l.b16 %v41
  %v383 = vunpack.c.l.b16 %v42
  %v384 = vunpack.c.l.b16 %v43
  %v385 = vunpack.c.l.b16 %v44
  %v386 = vunpack.c.l.b16 %v45
  %v387 = vunpack.c.l.b16 %v46
  %v388 = vunpack.c.l.b16 %v47
  %v389 = vunpack.c.l.b16 %v48
  %v390 = vunpack.c.l.b16 %v49
  %v391 = vunpack.c.l.b16 %v50
  %v392 = vunpack.c.l.b16 %v51
  %v393 = vunpack.c.l.b16 %v52
  %v394 = vunpack.c.l.b16 %v53
  %v395 = vunpack.c.l.b16 %v54
  %v396 = vunpack.c.l.b16 %v55
  %v397 = vunpack.c.l.b16 %v56
  %v398 = vunpack.c.l.b16 %v57
  %v399 = vunpack.c.l.b16 %v58
  %v400 = vunpack.c.l.b16 %v59
  %v401 = vunpack.c.l.b16 %v60
  %v402 = vpack.c.b16 %v371, %v370
  %v403 = vpack.c.b16 %v373, %v372
  %v404 = vpack.c.b16 %v375, %v374
  %v405 = vpack.c.b16 %v377, %v376
  %v406 = vpack.c.b16 %v379, %v378
  %v407 = vpack.c.b16 %v381, %v380
  %v408 = vpack.c.b16 %v383, %v382
  %v409 = vpack.c.b16 %v385, %v384
  %v410 = vpack.c.b16 %v387, %v386
  %v411 = vpack.c.b16 %v389, %v388
  %v412 = vpack.c.b16 %v391, %v390
  %v413 = vpack.c.b16 %v393, %v392
  %v414 = vpack.c.b16 %v395, %v394
  %v415 = vpack.c.b16 %v397, %v396
  %v416 = vpack.c.b16 %v399, %v398
  %v417 = vpack.c.b16 %v401, %v400
  %434 = vmatpush.bf16.msra.mxu0 %v409
  %435 = vmatpush.bf16.msra.mxu0 %v408
  %436 = vmatpush.bf16.msra.mxu0 %v407
  %437 = vmatpush.bf16.msra.mxu0 %v406
  %438 = vmatpush.bf16.msra.mxu0 %v405
  %439 = vmatpush.bf16.msra.mxu0 %v404
  %440 = vmatpush.bf16.msra.mxu0 %v403
  %441 = vmatpush.bf16.msra.mxu0 %v402
  %442 = vmatmul.bf16.gmra.mxu0 %v319
  %v443 = vpop.f32.mrf.mxu0
  %v444 = vadd.f32 %v336, %v443
  %v445 = vpop.f32.mrf.mxu0
  %v446 = vadd.f32 %v336, %v445
  %447 = vmatmul.bf16.gmra.mxu0 %v321
  %v448 = vpop.f32.mrf.mxu0
  %v449 = vadd.f32 %v336, %v448
  %v450 = vpop.f32.mrf.mxu0
  %v451 = vadd.f32 %v336, %v450
  %452 = vmatmul.bf16.gmra.mxu0 %v323
  %v453 = vpop.f32.mrf.mxu0
  %v454 = vadd.f32 %v336, %v453
  %v455 = vpop.f32.mrf.mxu0
  %v456 = vadd.f32 %v336, %v455
  %457 = vmatmul.bf16.gmra.mxu0 %v325
  %v458 = vpop.f32.mrf.mxu0
  %v459 = vadd.f32 %v336, %v458
  %v460 = vpop.f32.mrf.mxu0
  %v461 = vadd.f32 %v336, %v460
  %462 = vmatmul.bf16.gmra.mxu0 %v327
  %v463 = vpop.f32.mrf.mxu0
  %v464 = vadd.f32 %v336, %v463
  %v465 = vpop.f32.mrf.mxu0
  %v466 = vadd.f32 %v336, %v465
  %467 = vmatmul.bf16.gmra.mxu0 %v329
  %v468 = vpop.f32.mrf.mxu0
  %v469 = vadd.f32 %v336, %v468
  %v470 = vpop.f32.mrf.mxu0
  %v471 = vadd.f32 %v336, %v470
  %472 = vmatmul.bf16.gmra.mxu0 %v331
  %v473 = vpop.f32.mrf.mxu0
  %v474 = vadd.f32 %v336, %v473
  %v475 = vpop.f32.mrf.mxu0
  %v476 = vadd.f32 %v336, %v475
  %477 = vmatmul.bf16.gmra.mxu0 %v333
  %v478 = vpop.f32.mrf.mxu0
  %v479 = vadd.f32 %v336, %v478
  %v480 = vpop.f32.mrf.mxu0
  %v481 = vadd.f32 %v336, %v480
  %482 = vdwg.mxu0
  %483 = vmatpush.bf16.msra.mxu0 %v417
  %484 = vmatpush.bf16.msra.mxu0 %v416
  %485 = vmatpush.bf16.msra.mxu0 %v415
  %486 = vmatpush.bf16.msra.mxu0 %v414
  %487 = vmatpush.bf16.msra.mxu0 %v413
  %488 = vmatpush.bf16.msra.mxu0 %v412
  %489 = vmatpush.bf16.msra.mxu0 %v411
  %490 = vmatpush.bf16.msra.mxu0 %v410
  %491 = vmatmul.bf16.gmra.mxu0 %v320
  %v492 = vpop.f32.mrf.mxu0
  %v493 = vadd.f32 %v444, %v492
  %v494 = vpop.f32.mrf.mxu0
  %v495 = vadd.f32 %v446, %v494
  %496 = vmatmul.bf16.gmra.mxu0 %v322
  %v497 = vpop.f32.mrf.mxu0
  %v498 = vadd.f32 %v449, %v497
  %v499 = vpop.f32.mrf.mxu0
  %v500 = vadd.f32 %v451, %v499
  %501 = vmatmul.bf16.gmra.mxu0 %v324
  %v502 = vpop.f32.mrf.mxu0
  %v503 = vadd.f32 %v454, %v502
  %v504 = vpop.f32.mrf.mxu0
  %v505 = vadd.f32 %v456, %v504
  %506 = vmatmul.bf16.gmra.mxu0 %v326
  %v507 = vpop.f32.mrf.mxu0
  %v508 = vadd.f32 %v459, %v507
  %v509 = vpop.f32.mrf.mxu0
  %v510 = vadd.f32 %v461, %v509
  %511 = vmatmul.bf16.gmra.mxu0 %v328
  %v512 = vpop.f32.mrf.mxu0
  %v513 = vadd.f32 %v464, %v512
  %v514 = vpop.f32.mrf.mxu0
  %v515 = vadd.f32 %v466, %v514
  %516 = vmatmul.bf16.gmra.mxu0 %v330
  %v517 = vpop.f32.mrf.mxu0
  %v518 = vadd.f32 %v469, %v517
  %v519 = vpop.f32.mrf.mxu0
  %v520 = vadd.f32 %v471, %v519
  %521 = vmatmul.bf16.gmra.mxu0 %v332
  %v522 = vpop.f32.mrf.mxu0
  %v523 = vadd.f32 %v474, %v522
  %v524 = vpop.f32.mrf.mxu0
  %v525 = vadd.f32 %v476, %v524
  %526 = vmatmul.bf16.gmra.mxu0 %v334
  %v527 = vpop.f32.mrf.mxu0
  %v528 = vadd.f32 %v479, %v527
  %v529 = vpop.f32.mrf.mxu0
  %v530 = vadd.f32 %v481, %v529
  %531 = vdwg.mxu0
  %532 = vst.msk [vmem:[%s5] sm:$0xff] %vm164, %v493
  %533 = vst.msk [vmem:[%s5 + $0x8] sm:$0xff] %vm164, %v495
  %534 = vst.msk [vmem:[%s5 + $0x10] sm:$0xff] %vm164, %v498
  %535 = vst.msk [vmem:[%s5 + $0x18] sm:$0xff] %vm164, %v500
  %536 = vst.msk [vmem:[%s5 + $0x20] sm:$0xff] %vm164, %v503
  %537 = vst.msk [vmem:[%s5 + $0x28] sm:$0xff] %vm164, %v505
  %538 = vst.msk [vmem:[%s5 + $0x30] sm:$0xff] %vm164, %v508
  %539 = vst.msk [vmem:[%s5 + $0x38] sm:$0xff] %vm164, %v510
  %540 = vst.msk [vmem:[%s5 + $0x40] sm:$0xff] %vm164, %v513
  %541 = vst.msk [vmem:[%s5 + $0x48] sm:$0xff] %vm164, %v515
  %542 = vst.msk [vmem:[%s5 + $0x50] sm:$0xff] %vm164, %v518
  %543 = vst.msk [vmem:[%s5 + $0x58] sm:$0xff] %vm164, %v520
  %544 = vst.msk [vmem:[%s5 + $0x60] sm:$0xff] %vm164, %v523
  %545 = vst.msk [vmem:[%s5 + $0x68] sm:$0xff] %vm164, %v525
  %546 = vst.msk [vmem:[%s5 + $0x70] sm:$0xff] %vm164, %v528
  %547 = vst.msk [vmem:[%s5 + $0x78] sm:$0xff] %vm164, %v530
  %s548 = scalar_lea.vmem %s0, 64
  %v549 = vld [vmem:[%s548] sm:$0xf]
  %v550 = vld [vmem:[%s548 + $0x4] sm:$0xf]
  %v551 = vld [vmem:[%s548 + $0x8] sm:$0xf]
  %v552 = vld [vmem:[%s548 + $0xc] sm:$0xf]
  %v553 = vld [vmem:[%s548 + $0x10] sm:$0xf]
  %v554 = vld [vmem:[%s548 + $0x14] sm:$0xf]
  %v555 = vld [vmem:[%s548 + $0x18] sm:$0xf]
  %v556 = vld [vmem:[%s548 + $0x1c] sm:$0xf]
  %v557 = vld [vmem:[%s548 + $0x20] sm:$0xf]
  %v558 = vld [vmem:[%s548 + $0x24] sm:$0xf]
  %v559 = vld [vmem:[%s548 + $0x28] sm:$0xf]
  %v560 = vld [vmem:[%s548 + $0x2c] sm:$0xf]
  %v561 = vld [vmem:[%s548 + $0x30] sm:$0xf]
  %v562 = vld [vmem:[%s548 + $0x34] sm:$0xf]
  %v563 = vld [vmem:[%s548 + $0x38] sm:$0xf]
  %v564 = vld [vmem:[%s548 + $0x3c] sm:$0xf]
  %v581 = vunpack.c.l.b16 %v549
  %v582 = vunpack.c.l.b16 %v550
  %v583 = vunpack.c.l.b16 %v551
  %v584 = vunpack.c.l.b16 %v552
  %v585 = vunpack.c.l.b16 %v553
  %v586 = vunpack.c.l.b16 %v554
  %v587 = vunpack.c.l.b16 %v555
  %v588 = vunpack.c.l.b16 %v556
  %v589 = vunpack.c.l.b16 %v557
  %v590 = vunpack.c.l.b16 %v558
  %v591 = vunpack.c.l.b16 %v559
  %v592 = vunpack.c.l.b16 %v560
  %v593 = vunpack.c.l.b16 %v561
  %v594 = vunpack.c.l.b16 %v562
  %v595 = vunpack.c.l.b16 %v563
  %v596 = vunpack.c.l.b16 %v564
  %v597 = vpack.c.b16 %v582, %v581
  %v598 = vpack.c.b16 %v584, %v583
  %v599 = vpack.c.b16 %v586, %v585
  %v600 = vpack.c.b16 %v588, %v587
  %v601 = vpack.c.b16 %v590, %v589
  %v602 = vpack.c.b16 %v592, %v591
  %v603 = vpack.c.b16 %v594, %v593
  %v604 = vpack.c.b16 %v596, %v595
  %v606 = vsel %vm164, %v597, 0
  %v609 = vsel %vm164, %v598, 0
  %v612 = vsel %vm164, %v599, 0
  %v615 = vsel %vm164, %v600, 0
  %v618 = vsel %vm164, %v601, 0
  %v621 = vsel %vm164, %v602, 0
  %v624 = vsel %vm164, %v603, 0
  %v627 = vsel %vm164, %v604, 0
  %629 = vmatpush.bf16.msra.mxu0 0
  %630 = vmatpush.bf16.msra.mxu0 0
  %631 = vmatpush.bf16.msra.mxu0 0
  %632 = vmatpush.bf16.msra.mxu0 0
  %633 = vmatpush.bf16.msra.mxu0 %v154
  %634 = vmatpush.bf16.msra.mxu0 %v152
  %635 = vmatpush.bf16.msra.mxu0 %v150
  %636 = vmatpush.bf16.msra.mxu0 %v148
  %637 = vmatmul.bf16.gmra.mxu0 %v606
  %v638 = vpop.f32.mrf.mxu0
  %v639 = vadd.f32 %v80, %v638
  %v640 = vpop.f32.mrf.mxu0
  %v641 = vadd.f32 %v80, %v640
  %642 = vmatmul.bf16.gmra.mxu0 %v609
  %v643 = vpop.f32.mrf.mxu0
  %v644 = vadd.f32 %v80, %v643
  %v645 = vpop.f32.mrf.mxu0
  %v646 = vadd.f32 %v80, %v645
  %647 = vmatmul.bf16.gmra.mxu0 %v612
  %v648 = vpop.f32.mrf.mxu0
  %v649 = vadd.f32 %v80, %v648
  %v650 = vpop.f32.mrf.mxu0
  %v651 = vadd.f32 %v80, %v650
  %652 = vmatmul.bf16.gmra.mxu0 %v615
  %v653 = vpop.f32.mrf.mxu0
  %v654 = vadd.f32 %v80, %v653
  %v655 = vpop.f32.mrf.mxu0
  %v656 = vadd.f32 %v80, %v655
  %657 = vmatmul.bf16.gmra.mxu0 %v618
  %v658 = vpop.f32.mrf.mxu0
  %v659 = vadd.f32 %v80, %v658
  %v660 = vpop.f32.mrf.mxu0
  %v661 = vadd.f32 %v80, %v660
  %662 = vmatmul.bf16.gmra.mxu0 %v621
  %v663 = vpop.f32.mrf.mxu0
  %v664 = vadd.f32 %v80, %v663
  %v665 = vpop.f32.mrf.mxu0
  %v666 = vadd.f32 %v80, %v665
  %667 = vmatmul.bf16.gmra.mxu0 %v624
  %v668 = vpop.f32.mrf.mxu0
  %v669 = vadd.f32 %v80, %v668
  %v670 = vpop.f32.mrf.mxu0
  %v671 = vadd.f32 %v80, %v670
  %672 = vmatmul.bf16.gmra.mxu0 %v627
  %v673 = vpop.f32.mrf.mxu0
  %v674 = vadd.f32 %v80, %v673
  %v675 = vpop.f32.mrf.mxu0
  %v676 = vadd.f32 %v80, %v675
  %677 = vdwg.mxu0
  %678 = vmatpush.bf16.msra.mxu0 0
  %679 = vmatpush.bf16.msra.mxu0 0
  %680 = vmatpush.bf16.msra.mxu0 0
  %681 = vmatpush.bf16.msra.mxu0 0
  %682 = vmatpush.bf16.msra.mxu0 %v155
  %683 = vmatpush.bf16.msra.mxu0 %v153
  %684 = vmatpush.bf16.msra.mxu0 %v151
  %685 = vmatpush.bf16.msra.mxu0 %v149
  %686 = vmatmul.bf16.gmra.mxu0 %v606
  %v687 = vpop.f32.mrf.mxu0
  %v688 = vadd.f32 %v81, %v687
  %v689 = vpop.f32.mrf.mxu0
  %v690 = vadd.f32 %v81, %v689
  %691 = vmatmul.bf16.gmra.mxu0 %v609
  %v692 = vpop.f32.mrf.mxu0
  %v693 = vadd.f32 %v81, %v692
  %v694 = vpop.f32.mrf.mxu0
  %v695 = vadd.f32 %v81, %v694
  %696 = vmatmul.bf16.gmra.mxu0 %v612
  %v697 = vpop.f32.mrf.mxu0
  %v698 = vadd.f32 %v81, %v697
  %v699 = vpop.f32.mrf.mxu0
  %v700 = vadd.f32 %v81, %v699
  %701 = vmatmul.bf16.gmra.mxu0 %v615
  %v702 = vpop.f32.mrf.mxu0
  %v703 = vadd.f32 %v81, %v702
  %v704 = vpop.f32.mrf.mxu0
  %v705 = vadd.f32 %v81, %v704
  %706 = vmatmul.bf16.gmra.mxu0 %v618
  %v707 = vpop.f32.mrf.mxu0
  %v708 = vadd.f32 %v81, %v707
  %v709 = vpop.f32.mrf.mxu0
  %v710 = vadd.f32 %v81, %v709
  %711 = vmatmul.bf16.gmra.mxu0 %v621
  %v712 = vpop.f32.mrf.mxu0
  %v713 = vadd.f32 %v81, %v712
  %v714 = vpop.f32.mrf.mxu0
  %v715 = vadd.f32 %v81, %v714
  %716 = vmatmul.bf16.gmra.mxu0 %v624
  %v717 = vpop.f32.mrf.mxu0
  %v718 = vadd.f32 %v81, %v717
  %v719 = vpop.f32.mrf.mxu0
  %v720 = vadd.f32 %v81, %v719
  %721 = vmatmul.bf16.gmra.mxu0 %v627
  %v722 = vpop.f32.mrf.mxu0
  %v723 = vadd.f32 %v81, %v722
  %v724 = vpop.f32.mrf.mxu0
  %v725 = vadd.f32 %v81, %v724
  %726 = vdwg.mxu0
  %v727 = vmax.f32 %v639, 0.0
  %v728 = vmax.f32 %v688, 0.0
  %v729 = vmax.f32 %v641, 0.0
  %v730 = vmax.f32 %v690, 0.0
  %v731 = vmax.f32 %v644, 0.0
  %v732 = vmax.f32 %v693, 0.0
  %v733 = vmax.f32 %v646, 0.0
  %v734 = vmax.f32 %v695, 0.0
  %v735 = vmax.f32 %v649, 0.0
  %v736 = vmax.f32 %v698, 0.0
  %v737 = vmax.f32 %v651, 0.0
  %v738 = vmax.f32 %v700, 0.0
  %v739 = vmax.f32 %v654, 0.0
  %v740 = vmax.f32 %v703, 0.0
  %v741 = vmax.f32 %v656, 0.0
  %v742 = vmax.f32 %v705, 0.0
  %v743 = vmax.f32 %v659, 0.0
  %v744 = vmax.f32 %v708, 0.0
  %v745 = vmax.f32 %v661, 0.0
  %v746 = vmax.f32 %v710, 0.0
  %v747 = vmax.f32 %v664, 0.0
  %v748 = vmax.f32 %v713, 0.0
  %v749 = vmax.f32 %v666, 0.0
  %v750 = vmax.f32 %v715, 0.0
  %v751 = vmax.f32 %v669, 0.0
  %v752 = vmax.f32 %v718, 0.0
  %v753 = vmax.f32 %v671, 0.0
  %v754 = vmax.f32 %v720, 0.0
  %v755 = vmax.f32 %v674, 0.0
  %v756 = vmax.f32 %v723, 0.0
  %v757 = vmax.f32 %v676, 0.0
  %v758 = vmax.f32 %v725, 0.0
  %v759 = vpack.c.bf16 %v729, %v727
  %v760 = vpack.c.bf16 %v730, %v728
  %v761 = vpack.c.bf16 %v733, %v731
  %v762 = vpack.c.bf16 %v734, %v732
  %v763 = vpack.c.bf16 %v737, %v735
  %v764 = vpack.c.bf16 %v738, %v736
  %v765 = vpack.c.bf16 %v741, %v739
  %v766 = vpack.c.bf16 %v742, %v740
  %v767 = vpack.c.bf16 %v745, %v743
  %v768 = vpack.c.bf16 %v746, %v744
  %v769 = vpack.c.bf16 %v749, %v747
  %v770 = vpack.c.bf16 %v750, %v748
  %v771 = vpack.c.bf16 %v753, %v751
  %v772 = vpack.c.bf16 %v754, %v752
  %v773 = vpack.c.bf16 %v757, %v755
  %v774 = vpack.c.bf16 %v758, %v756
  %775 = vmatpush.bf16.msra.mxu0 %v409
  %776 = vmatpush.bf16.msra.mxu0 %v408
  %777 = vmatpush.bf16.msra.mxu0 %v407
  %778 = vmatpush.bf16.msra.mxu0 %v406
  %779 = vmatpush.bf16.msra.mxu0 %v405
  %780 = vmatpush.bf16.msra.mxu0 %v404
  %781 = vmatpush.bf16.msra.mxu0 %v403
  %782 = vmatpush.bf16.msra.mxu0 %v402
  %783 = vmatmul.bf16.gmra.mxu0 %v759
  %v784 = vpop.f32.mrf.mxu0
  %v785 = vadd.f32 %v336, %v784
  %v786 = vpop.f32.mrf.mxu0
  %v787 = vadd.f32 %v336, %v786
  %788 = vmatmul.bf16.gmra.mxu0 %v761
  %v789 = vpop.f32.mrf.mxu0
  %v790 = vadd.f32 %v336, %v789
  %v791 = vpop.f32.mrf.mxu0
  %v792 = vadd.f32 %v336, %v791
  %793 = vmatmul.bf16.gmra.mxu0 %v763
  %v794 = vpop.f32.mrf.mxu0
  %v795 = vadd.f32 %v336, %v794
  %v796 = vpop.f32.mrf.mxu0
  %v797 = vadd.f32 %v336, %v796
  %798 = vmatmul.bf16.gmra.mxu0 %v765
  %v799 = vpop.f32.mrf.mxu0
  %v800 = vadd.f32 %v336, %v799
  %v801 = vpop.f32.mrf.mxu0
  %v802 = vadd.f32 %v336, %v801
  %803 = vmatmul.bf16.gmra.mxu0 %v767
  %v804 = vpop.f32.mrf.mxu0
  %v805 = vadd.f32 %v336, %v804
  %v806 = vpop.f32.mrf.mxu0
  %v807 = vadd.f32 %v336, %v806
  %808 = vmatmul.bf16.gmra.mxu0 %v769
  %v809 = vpop.f32.mrf.mxu0
  %v810 = vadd.f32 %v336, %v809
  %v811 = vpop.f32.mrf.mxu0
  %v812 = vadd.f32 %v336, %v811
  %813 = vmatmul.bf16.gmra.mxu0 %v771
  %v814 = vpop.f32.mrf.mxu0
  %v815 = vadd.f32 %v336, %v814
  %v816 = vpop.f32.mrf.mxu0
  %v817 = vadd.f32 %v336, %v816
  %818 = vmatmul.bf16.gmra.mxu0 %v773
  %v819 = vpop.f32.mrf.mxu0
  %v820 = vadd.f32 %v336, %v819
  %v821 = vpop.f32.mrf.mxu0
  %v822 = vadd.f32 %v336, %v821
  %823 = vdwg.mxu0
  %824 = vmatpush.bf16.msra.mxu0 %v417
  %825 = vmatpush.bf16.msra.mxu0 %v416
  %826 = vmatpush.bf16.msra.mxu0 %v415
  %827 = vmatpush.bf16.msra.mxu0 %v414
  %828 = vmatpush.bf16.msra.mxu0 %v413
  %829 = vmatpush.bf16.msra.mxu0 %v412
  %830 = vmatpush.bf16.msra.mxu0 %v411
  %831 = vmatpush.bf16.msra.mxu0 %v410
  %832 = vmatmul.bf16.gmra.mxu0 %v760
  %v833 = vpop.f32.mrf.mxu0
  %v834 = vadd.f32 %v785, %v833
  %v835 = vpop.f32.mrf.mxu0
  %v836 = vadd.f32 %v787, %v835
  %837 = vmatmul.bf16.gmra.mxu0 %v762
  %v838 = vpop.f32.mrf.mxu0
  %v839 = vadd.f32 %v790, %v838
  %v840 = vpop.f32.mrf.mxu0
  %v841 = vadd.f32 %v792, %v840
  %842 = vmatmul.bf16.gmra.mxu0 %v764
  %v843 = vpop.f32.mrf.mxu0
  %v844 = vadd.f32 %v795, %v843
  %v845 = vpop.f32.mrf.mxu0
  %v846 = vadd.f32 %v797, %v845
  %847 = vmatmul.bf16.gmra.mxu0 %v766
  %v848 = vpop.f32.mrf.mxu0
  %v849 = vadd.f32 %v800, %v848
  %v850 = vpop.f32.mrf.mxu0
  %v851 = vadd.f32 %v802, %v850
  %852 = vmatmul.bf16.gmra.mxu0 %v768
  %v853 = vpop.f32.mrf.mxu0
  %v854 = vadd.f32 %v805, %v853
  %v855 = vpop.f32.mrf.mxu0
  %v856 = vadd.f32 %v807, %v855
  %857 = vmatmul.bf16.gmra.mxu0 %v770
  %v858 = vpop.f32.mrf.mxu0
  %v859 = vadd.f32 %v810, %v858
  %v860 = vpop.f32.mrf.mxu0
  %v861 = vadd.f32 %v812, %v860
  %862 = vmatmul.bf16.gmra.mxu0 %v772
  %v863 = vpop.f32.mrf.mxu0
  %v864 = vadd.f32 %v815, %v863
  %v865 = vpop.f32.mrf.mxu0
  %v866 = vadd.f32 %v817, %v865
  %867 = vmatmul.bf16.gmra.mxu0 %v774
  %v868 = vpop.f32.mrf.mxu0
  %v869 = vadd.f32 %v820, %v868
  %v870 = vpop.f32.mrf.mxu0
  %v871 = vadd.f32 %v822, %v870
  %872 = vdwg.mxu0
  %s873 = scalar_lea.vmem %s5, 128
  %874 = vst.msk [vmem:[%s873] sm:$0xff] %vm164, %v834
  %875 = vst.msk [vmem:[%s873 + $0x8] sm:$0xff] %vm164, %v836
  %876 = vst.msk [vmem:[%s873 + $0x10] sm:$0xff] %vm164, %v839
  %877 = vst.msk [vmem:[%s873 + $0x18] sm:$0xff] %vm164, %v841
  %878 = vst.msk [vmem:[%s873 + $0x20] sm:$0xff] %vm164, %v844
  %879 = vst.msk [vmem:[%s873 + $0x28] sm:$0xff] %vm164, %v846
  %880 = vst.msk [vmem:[%s873 + $0x30] sm:$0xff] %vm164, %v849
  %881 = vst.msk [vmem:[%s873 + $0x38] sm:$0xff] %vm164, %v851
  %882 = vst.msk [vmem:[%s873 + $0x40] sm:$0xff] %vm164, %v854
  %883 = vst.msk [vmem:[%s873 + $0x48] sm:$0xff] %vm164, %v856
  %884 = vst.msk [vmem:[%s873 + $0x50] sm:$0xff] %vm164, %v859
  %885 = vst.msk [vmem:[%s873 + $0x58] sm:$0xff] %vm164, %v861
  %886 = vst.msk [vmem:[%s873 + $0x60] sm:$0xff] %vm164, %v864
  %887 = vst.msk [vmem:[%s873 + $0x68] sm:$0xff] %vm164, %v866
  %888 = vst.msk [vmem:[%s873 + $0x70] sm:$0xff] %vm164, %v869
  %889 = vst.msk [vmem:[%s873 + $0x78] sm:$0xff] %vm164, %v871
  %s890 = scalar_lea.vmem %s0, 128
  %v891 = vld [vmem:[%s890] sm:$0xf]
  %v892 = vld [vmem:[%s890 + $0x4] sm:$0xf]
  %v893 = vld [vmem:[%s890 + $0x8] sm:$0xf]
  %v894 = vld [vmem:[%s890 + $0xc] sm:$0xf]
  %v895 = vld [vmem:[%s890 + $0x10] sm:$0xf]
  %v896 = vld [vmem:[%s890 + $0x14] sm:$0xf]
  %v897 = vld [vmem:[%s890 + $0x18] sm:$0xf]
  %v898 = vld [vmem:[%s890 + $0x1c] sm:$0xf]
  %v899 = vld [vmem:[%s890 + $0x20] sm:$0xf]
  %v900 = vld [vmem:[%s890 + $0x24] sm:$0xf]
  %v901 = vld [vmem:[%s890 + $0x28] sm:$0xf]
  %v902 = vld [vmem:[%s890 + $0x2c] sm:$0xf]
  %v903 = vld [vmem:[%s890 + $0x30] sm:$0xf]
  %v904 = vld [vmem:[%s890 + $0x34] sm:$0xf]
  %v905 = vld [vmem:[%s890 + $0x38] sm:$0xf]
  %v906 = vld [vmem:[%s890 + $0x3c] sm:$0xf]
  %v923 = vunpack.c.l.b16 %v891
  %v924 = vunpack.c.l.b16 %v892
  %v925 = vunpack.c.l.b16 %v893
  %v926 = vunpack.c.l.b16 %v894
  %v927 = vunpack.c.l.b16 %v895
  %v928 = vunpack.c.l.b16 %v896
  %v929 = vunpack.c.l.b16 %v897
  %v930 = vunpack.c.l.b16 %v898
  %v931 = vunpack.c.l.b16 %v899
  %v932 = vunpack.c.l.b16 %v900
  %v933 = vunpack.c.l.b16 %v901
  %v934 = vunpack.c.l.b16 %v902
  %v935 = vunpack.c.l.b16 %v903
  %v936 = vunpack.c.l.b16 %v904
  %v937 = vunpack.c.l.b16 %v905
  %v938 = vunpack.c.l.b16 %v906
  %v939 = vpack.c.b16 %v924, %v923
  %v940 = vpack.c.b16 %v926, %v925
  %v941 = vpack.c.b16 %v928, %v927
  %v942 = vpack.c.b16 %v930, %v929
  %v943 = vpack.c.b16 %v932, %v931
  %v944 = vpack.c.b16 %v934, %v933
  %v945 = vpack.c.b16 %v936, %v935
  %v946 = vpack.c.b16 %v938, %v937
  %v948 = vsel %vm164, %v939, 0
  %v951 = vsel %vm164, %v940, 0
  %v954 = vsel %vm164, %v941, 0
  %v957 = vsel %vm164, %v942, 0
  %v960 = vsel %vm164, %v943, 0
  %v963 = vsel %vm164, %v944, 0
  %v966 = vsel %vm164, %v945, 0
  %v969 = vsel %vm164, %v946, 0
  %971 = vmatpush.bf16.msra.mxu0 0
  %972 = vmatpush.bf16.msra.mxu0 0
  %973 = vmatpush.bf16.msra.mxu0 0
  %974 = vmatpush.bf16.msra.mxu0 0
  %975 = vmatpush.bf16.msra.mxu0 %v154
  %976 = vmatpush.bf16.msra.mxu0 %v152
  %977 = vmatpush.bf16.msra.mxu0 %v150
  %978 = vmatpush.bf16.msra.mxu0 %v148
  %979 = vmatmul.bf16.gmra.mxu0 %v948
  %v980 = vpop.f32.mrf.mxu0
  %v981 = vadd.f32 %v80, %v980
  %v982 = vpop.f32.mrf.mxu0
  %v983 = vadd.f32 %v80, %v982
  %984 = vmatmul.bf16.gmra.mxu0 %v951
  %v985 = vpop.f32.mrf.mxu0
  %v986 = vadd.f32 %v80, %v985
  %v987 = vpop.f32.mrf.mxu0
  %v988 = vadd.f32 %v80, %v987
  %989 = vmatmul.bf16.gmra.mxu0 %v954
  %v990 = vpop.f32.mrf.mxu0
  %v991 = vadd.f32 %v80, %v990
  %v992 = vpop.f32.mrf.mxu0
  %v993 = vadd.f32 %v80, %v992
  %994 = vmatmul.bf16.gmra.mxu0 %v957
  %v995 = vpop.f32.mrf.mxu0
  %v996 = vadd.f32 %v80, %v995
  %v997 = vpop.f32.mrf.mxu0
  %v998 = vadd.f32 %v80, %v997
  %999 = vmatmul.bf16.gmra.mxu0 %v960
  %v1000 = vpop.f32.mrf.mxu0
  %v1001 = vadd.f32 %v80, %v1000
  %v1002 = vpop.f32.mrf.mxu0
  %v1003 = vadd.f32 %v80, %v1002
  %1004 = vmatmul.bf16.gmra.mxu0 %v963
  %v1005 = vpop.f32.mrf.mxu0
  %v1006 = vadd.f32 %v80, %v1005
  %v1007 = vpop.f32.mrf.mxu0
  %v1008 = vadd.f32 %v80, %v1007
  %1009 = vmatmul.bf16.gmra.mxu0 %v966
  %v1010 = vpop.f32.mrf.mxu0
  %v1011 = vadd.f32 %v80, %v1010
  %v1012 = vpop.f32.mrf.mxu0
  %v1013 = vadd.f32 %v80, %v1012
  %1014 = vmatmul.bf16.gmra.mxu0 %v969
  %v1015 = vpop.f32.mrf.mxu0
  %v1016 = vadd.f32 %v80, %v1015
  %v1017 = vpop.f32.mrf.mxu0
  %v1018 = vadd.f32 %v80, %v1017
  %1019 = vdwg.mxu0
  %1020 = vmatpush.bf16.msra.mxu0 0
  %1021 = vmatpush.bf16.msra.mxu0 0
  %1022 = vmatpush.bf16.msra.mxu0 0
  %1023 = vmatpush.bf16.msra.mxu0 0
  %1024 = vmatpush.bf16.msra.mxu0 %v155
  %1025 = vmatpush.bf16.msra.mxu0 %v153
  %1026 = vmatpush.bf16.msra.mxu0 %v151
  %1027 = vmatpush.bf16.msra.mxu0 %v149
  %1028 = vmatmul.bf16.gmra.mxu0 %v948
  %v1029 = vpop.f32.mrf.mxu0
  %v1030 = vadd.f32 %v81, %v1029
  %v1031 = vpop.f32.mrf.mxu0
  %v1032 = vadd.f32 %v81, %v1031
  %1033 = vmatmul.bf16.gmra.mxu0 %v951
  %v1034 = vpop.f32.mrf.mxu0
  %v1035 = vadd.f32 %v81, %v1034
  %v1036 = vpop.f32.mrf.mxu0
  %v1037 = vadd.f32 %v81, %v1036
  %1038 = vmatmul.bf16.gmra.mxu0 %v954
  %v1039 = vpop.f32.mrf.mxu0
  %v1040 = vadd.f32 %v81, %v1039
  %v1041 = vpop.f32.mrf.mxu0
  %v1042 = vadd.f32 %v81, %v1041
  %1043 = vmatmul.bf16.gmra.mxu0 %v957
  %v1044 = vpop.f32.mrf.mxu0
  %v1045 = vadd.f32 %v81, %v1044
  %v1046 = vpop.f32.mrf.mxu0
  %v1047 = vadd.f32 %v81, %v1046
  %1048 = vmatmul.bf16.gmra.mxu0 %v960
  %v1049 = vpop.f32.mrf.mxu0
  %v1050 = vadd.f32 %v81, %v1049
  %v1051 = vpop.f32.mrf.mxu0
  %v1052 = vadd.f32 %v81, %v1051
  %1053 = vmatmul.bf16.gmra.mxu0 %v963
  %v1054 = vpop.f32.mrf.mxu0
  %v1055 = vadd.f32 %v81, %v1054
  %v1056 = vpop.f32.mrf.mxu0
  %v1057 = vadd.f32 %v81, %v1056
  %1058 = vmatmul.bf16.gmra.mxu0 %v966
  %v1059 = vpop.f32.mrf.mxu0
  %v1060 = vadd.f32 %v81, %v1059
  %v1061 = vpop.f32.mrf.mxu0
  %v1062 = vadd.f32 %v81, %v1061
  %1063 = vmatmul.bf16.gmra.mxu0 %v969
  %v1064 = vpop.f32.mrf.mxu0
  %v1065 = vadd.f32 %v81, %v1064
  %v1066 = vpop.f32.mrf.mxu0
  %v1067 = vadd.f32 %v81, %v1066
  %1068 = vdwg.mxu0
  %v1069 = vmax.f32 %v981, 0.0
  %v1070 = vmax.f32 %v1030, 0.0
  %v1071 = vmax.f32 %v983, 0.0
  %v1072 = vmax.f32 %v1032, 0.0
  %v1073 = vmax.f32 %v986, 0.0
  %v1074 = vmax.f32 %v1035, 0.0
  %v1075 = vmax.f32 %v988, 0.0
  %v1076 = vmax.f32 %v1037, 0.0
  %v1077 = vmax.f32 %v991, 0.0
  %v1078 = vmax.f32 %v1040, 0.0
  %v1079 = vmax.f32 %v993, 0.0
  %v1080 = vmax.f32 %v1042, 0.0
  %v1081 = vmax.f32 %v996, 0.0
  %v1082 = vmax.f32 %v1045, 0.0
  %v1083 = vmax.f32 %v998, 0.0
  %v1084 = vmax.f32 %v1047, 0.0
  %v1085 = vmax.f32 %v1001, 0.0
  %v1086 = vmax.f32 %v1050, 0.0
  %v1087 = vmax.f32 %v1003, 0.0
  %v1088 = vmax.f32 %v1052, 0.0
  %v1089 = vmax.f32 %v1006, 0.0
  %v1090 = vmax.f32 %v1055, 0.0
  %v1091 = vmax.f32 %v1008, 0.0
  %v1092 = vmax.f32 %v1057, 0.0
  %v1093 = vmax.f32 %v1011, 0.0
  %v1094 = vmax.f32 %v1060, 0.0
  %v1095 = vmax.f32 %v1013, 0.0
  %v1096 = vmax.f32 %v1062, 0.0
  %v1097 = vmax.f32 %v1016, 0.0
  %v1098 = vmax.f32 %v1065, 0.0
  %v1099 = vmax.f32 %v1018, 0.0
  %v1100 = vmax.f32 %v1067, 0.0
  %v1101 = vpack.c.bf16 %v1071, %v1069
  %v1102 = vpack.c.bf16 %v1072, %v1070
  %v1103 = vpack.c.bf16 %v1075, %v1073
  %v1104 = vpack.c.bf16 %v1076, %v1074
  %v1105 = vpack.c.bf16 %v1079, %v1077
  %v1106 = vpack.c.bf16 %v1080, %v1078
  %v1107 = vpack.c.bf16 %v1083, %v1081
  %v1108 = vpack.c.bf16 %v1084, %v1082
  %v1109 = vpack.c.bf16 %v1087, %v1085
  %v1110 = vpack.c.bf16 %v1088, %v1086
  %v1111 = vpack.c.bf16 %v1091, %v1089
  %v1112 = vpack.c.bf16 %v1092, %v1090
  %v1113 = vpack.c.bf16 %v1095, %v1093
  %v1114 = vpack.c.bf16 %v1096, %v1094
  %v1115 = vpack.c.bf16 %v1099, %v1097
  %v1116 = vpack.c.bf16 %v1100, %v1098
  %1117 = vmatpush.bf16.msra.mxu0 %v409
  %1118 = vmatpush.bf16.msra.mxu0 %v408
  %1119 = vmatpush.bf16.msra.mxu0 %v407
  %1120 = vmatpush.bf16.msra.mxu0 %v406
  %1121 = vmatpush.bf16.msra.mxu0 %v405
  %1122 = vmatpush.bf16.msra.mxu0 %v404
  %1123 = vmatpush.bf16.msra.mxu0 %v403
  %1124 = vmatpush.bf16.msra.mxu0 %v402
  %1125 = vmatmul.bf16.gmra.mxu0 %v1101
  %v1126 = vpop.f32.mrf.mxu0
  %v1127 = vadd.f32 %v336, %v1126
  %v1128 = vpop.f32.mrf.mxu0
  %v1129 = vadd.f32 %v336, %v1128
  %1130 = vmatmul.bf16.gmra.mxu0 %v1103
  %v1131 = vpop.f32.mrf.mxu0
  %v1132 = vadd.f32 %v336, %v1131
  %v1133 = vpop.f32.mrf.mxu0
  %v1134 = vadd.f32 %v336, %v1133
  %1135 = vmatmul.bf16.gmra.mxu0 %v1105
  %v1136 = vpop.f32.mrf.mxu0
  %v1137 = vadd.f32 %v336, %v1136
  %v1138 = vpop.f32.mrf.mxu0
  %v1139 = vadd.f32 %v336, %v1138
  %1140 = vmatmul.bf16.gmra.mxu0 %v1107
  %v1141 = vpop.f32.mrf.mxu0
  %v1142 = vadd.f32 %v336, %v1141
  %v1143 = vpop.f32.mrf.mxu0
  %v1144 = vadd.f32 %v336, %v1143
  %1145 = vmatmul.bf16.gmra.mxu0 %v1109
  %v1146 = vpop.f32.mrf.mxu0
  %v1147 = vadd.f32 %v336, %v1146
  %v1148 = vpop.f32.mrf.mxu0
  %v1149 = vadd.f32 %v336, %v1148
  %1150 = vmatmul.bf16.gmra.mxu0 %v1111
  %v1151 = vpop.f32.mrf.mxu0
  %v1152 = vadd.f32 %v336, %v1151
  %v1153 = vpop.f32.mrf.mxu0
  %v1154 = vadd.f32 %v336, %v1153
  %1155 = vmatmul.bf16.gmra.mxu0 %v1113
  %v1156 = vpop.f32.mrf.mxu0
  %v1157 = vadd.f32 %v336, %v1156
  %v1158 = vpop.f32.mrf.mxu0
  %v1159 = vadd.f32 %v336, %v1158
  %1160 = vmatmul.bf16.gmra.mxu0 %v1115
  %v1161 = vpop.f32.mrf.mxu0
  %v1162 = vadd.f32 %v336, %v1161
  %v1163 = vpop.f32.mrf.mxu0
  %v1164 = vadd.f32 %v336, %v1163
  %1165 = vdwg.mxu0
  %1166 = vmatpush.bf16.msra.mxu0 %v417
  %1167 = vmatpush.bf16.msra.mxu0 %v416
  %1168 = vmatpush.bf16.msra.mxu0 %v415
  %1169 = vmatpush.bf16.msra.mxu0 %v414
  %1170 = vmatpush.bf16.msra.mxu0 %v413
  %1171 = vmatpush.bf16.msra.mxu0 %v412
  %1172 = vmatpush.bf16.msra.mxu0 %v411
  %1173 = vmatpush.bf16.msra.mxu0 %v410
  %1174 = vmatmul.bf16.gmra.mxu0 %v1102
  %v1175 = vpop.f32.mrf.mxu0
  %v1176 = vadd.f32 %v1127, %v1175
  %v1177 = vpop.f32.mrf.mxu0
  %v1178 = vadd.f32 %v1129, %v1177
  %1179 = vmatmul.bf16.gmra.mxu0 %v1104
  %v1180 = vpop.f32.mrf.mxu0
  %v1181 = vadd.f32 %v1132, %v1180
  %v1182 = vpop.f32.mrf.mxu0
  %v1183 = vadd.f32 %v1134, %v1182
  %1184 = vmatmul.bf16.gmra.mxu0 %v1106
  %v1185 = vpop.f32.mrf.mxu0
  %v1186 = vadd.f32 %v1137, %v1185
  %v1187 = vpop.f32.mrf.mxu0
  %v1188 = vadd.f32 %v1139, %v1187
  %1189 = vmatmul.bf16.gmra.mxu0 %v1108
  %v1190 = vpop.f32.mrf.mxu0
  %v1191 = vadd.f32 %v1142, %v1190
  %v1192 = vpop.f32.mrf.mxu0
  %v1193 = vadd.f32 %v1144, %v1192
  %1194 = vmatmul.bf16.gmra.mxu0 %v1110
  %v1195 = vpop.f32.mrf.mxu0
  %v1196 = vadd.f32 %v1147, %v1195
  %v1197 = vpop.f32.mrf.mxu0
  %v1198 = vadd.f32 %v1149, %v1197
  %1199 = vmatmul.bf16.gmra.mxu0 %v1112
  %v1200 = vpop.f32.mrf.mxu0
  %v1201 = vadd.f32 %v1152, %v1200
  %v1202 = vpop.f32.mrf.mxu0
  %v1203 = vadd.f32 %v1154, %v1202
  %1204 = vmatmul.bf16.gmra.mxu0 %v1114
  %v1205 = vpop.f32.mrf.mxu0
  %v1206 = vadd.f32 %v1157, %v1205
  %v1207 = vpop.f32.mrf.mxu0
  %v1208 = vadd.f32 %v1159, %v1207
  %1209 = vmatmul.bf16.gmra.mxu0 %v1116
  %v1210 = vpop.f32.mrf.mxu0
  %v1211 = vadd.f32 %v1162, %v1210
  %v1212 = vpop.f32.mrf.mxu0
  %v1213 = vadd.f32 %v1164, %v1212
  %1214 = vdwg.mxu0
  %s1215 = scalar_lea.vmem %s5, 256
  %1216 = vst.msk [vmem:[%s1215] sm:$0xff] %vm164, %v1176
  %1217 = vst.msk [vmem:[%s1215 + $0x8] sm:$0xff] %vm164, %v1178
  %1218 = vst.msk [vmem:[%s1215 + $0x10] sm:$0xff] %vm164, %v1181
  %1219 = vst.msk [vmem:[%s1215 + $0x18] sm:$0xff] %vm164, %v1183
  %1220 = vst.msk [vmem:[%s1215 + $0x20] sm:$0xff] %vm164, %v1186
  %1221 = vst.msk [vmem:[%s1215 + $0x28] sm:$0xff] %vm164, %v1188
  %1222 = vst.msk [vmem:[%s1215 + $0x30] sm:$0xff] %vm164, %v1191
  %1223 = vst.msk [vmem:[%s1215 + $0x38] sm:$0xff] %vm164, %v1193
  %1224 = vst.msk [vmem:[%s1215 + $0x40] sm:$0xff] %vm164, %v1196
  %1225 = vst.msk [vmem:[%s1215 + $0x48] sm:$0xff] %vm164, %v1198
  %1226 = vst.msk [vmem:[%s1215 + $0x50] sm:$0xff] %vm164, %v1201
  %1227 = vst.msk [vmem:[%s1215 + $0x58] sm:$0xff] %vm164, %v1203
  %1228 = vst.msk [vmem:[%s1215 + $0x60] sm:$0xff] %vm164, %v1206
  %1229 = vst.msk [vmem:[%s1215 + $0x68] sm:$0xff] %vm164, %v1208
  %1230 = vst.msk [vmem:[%s1215 + $0x70] sm:$0xff] %vm164, %v1211
  %1231 = vst.msk [vmem:[%s1215 + $0x78] sm:$0xff] %vm164, %v1213
  %s1232 = scalar_lea.vmem %s0, 192
  %v1233 = vld [vmem:[%s1232] sm:$0xf]
  %v1234 = vld [vmem:[%s1232 + $0x4] sm:$0xf]
  %v1235 = vld [vmem:[%s1232 + $0x8] sm:$0xf]
  %v1236 = vld [vmem:[%s1232 + $0xc] sm:$0xf]
  %v1237 = vld [vmem:[%s1232 + $0x10] sm:$0xf]
  %v1238 = vld [vmem:[%s1232 + $0x14] sm:$0xf]
  %v1239 = vld [vmem:[%s1232 + $0x18] sm:$0xf]
  %v1240 = vld [vmem:[%s1232 + $0x1c] sm:$0xf]
  %v1241 = vld [vmem:[%s1232 + $0x20] sm:$0xf]
  %v1242 = vld [vmem:[%s1232 + $0x24] sm:$0xf]
  %v1243 = vld [vmem:[%s1232 + $0x28] sm:$0xf]
  %v1244 = vld [vmem:[%s1232 + $0x2c] sm:$0xf]
  %v1245 = vld [vmem:[%s1232 + $0x30] sm:$0xf]
  %v1246 = vld [vmem:[%s1232 + $0x34] sm:$0xf]
  %v1247 = vld [vmem:[%s1232 + $0x38] sm:$0xf]
  %v1248 = vld [vmem:[%s1232 + $0x3c] sm:$0xf]
  %v1265 = vunpack.c.l.b16 %v1233
  %v1266 = vunpack.c.l.b16 %v1234
  %v1267 = vunpack.c.l.b16 %v1235
  %v1268 = vunpack.c.l.b16 %v1236
  %v1269 = vunpack.c.l.b16 %v1237
  %v1270 = vunpack.c.l.b16 %v1238
  %v1271 = vunpack.c.l.b16 %v1239
  %v1272 = vunpack.c.l.b16 %v1240
  %v1273 = vunpack.c.l.b16 %v1241
  %v1274 = vunpack.c.l.b16 %v1242
  %v1275 = vunpack.c.l.b16 %v1243
  %v1276 = vunpack.c.l.b16 %v1244
  %v1277 = vunpack.c.l.b16 %v1245
  %v1278 = vunpack.c.l.b16 %v1246
  %v1279 = vunpack.c.l.b16 %v1247
  %v1280 = vunpack.c.l.b16 %v1248
  %v1281 = vpack.c.b16 %v1266, %v1265
  %v1282 = vpack.c.b16 %v1268, %v1267
  %v1283 = vpack.c.b16 %v1270, %v1269
  %v1284 = vpack.c.b16 %v1272, %v1271
  %v1285 = vpack.c.b16 %v1274, %v1273
  %v1286 = vpack.c.b16 %v1276, %v1275
  %v1287 = vpack.c.b16 %v1278, %v1277
  %v1288 = vpack.c.b16 %v1280, %v1279
  %v1290 = vsel %vm164, %v1281, 0
  %v1293 = vsel %vm164, %v1282, 0
  %v1296 = vsel %vm164, %v1283, 0
  %v1299 = vsel %vm164, %v1284, 0
  %v1302 = vsel %vm164, %v1285, 0
  %v1305 = vsel %vm164, %v1286, 0
  %v1308 = vsel %vm164, %v1287, 0
  %v1311 = vsel %vm164, %v1288, 0
  %1313 = vmatpush.bf16.msra.mxu0 0
  %1314 = vmatpush.bf16.msra.mxu0 0
  %1315 = vmatpush.bf16.msra.mxu0 0
  %1316 = vmatpush.bf16.msra.mxu0 0
  %1317 = vmatpush.bf16.msra.mxu0 %v154
  %1318 = vmatpush.bf16.msra.mxu0 %v152
  %1319 = vmatpush.bf16.msra.mxu0 %v150
  %1320 = vmatpush.bf16.msra.mxu0 %v148
  %1321 = vmatmul.bf16.gmra.mxu0 %v1290
  %v1322 = vpop.f32.mrf.mxu0
  %v1323 = vadd.f32 %v80, %v1322
  %v1324 = vpop.f32.mrf.mxu0
  %v1325 = vadd.f32 %v80, %v1324
  %1326 = vmatmul.bf16.gmra.mxu0 %v1293
  %v1327 = vpop.f32.mrf.mxu0
  %v1328 = vadd.f32 %v80, %v1327
  %v1329 = vpop.f32.mrf.mxu0
  %v1330 = vadd.f32 %v80, %v1329
  %1331 = vmatmul.bf16.gmra.mxu0 %v1296
  %v1332 = vpop.f32.mrf.mxu0
  %v1333 = vadd.f32 %v80, %v1332
  %v1334 = vpop.f32.mrf.mxu0
  %v1335 = vadd.f32 %v80, %v1334
  %1336 = vmatmul.bf16.gmra.mxu0 %v1299
  %v1337 = vpop.f32.mrf.mxu0
  %v1338 = vadd.f32 %v80, %v1337
  %v1339 = vpop.f32.mrf.mxu0
  %v1340 = vadd.f32 %v80, %v1339
  %1341 = vmatmul.bf16.gmra.mxu0 %v1302
  %v1342 = vpop.f32.mrf.mxu0
  %v1343 = vadd.f32 %v80, %v1342
  %v1344 = vpop.f32.mrf.mxu0
  %v1345 = vadd.f32 %v80, %v1344
  %1346 = vmatmul.bf16.gmra.mxu0 %v1305
  %v1347 = vpop.f32.mrf.mxu0
  %v1348 = vadd.f32 %v80, %v1347
  %v1349 = vpop.f32.mrf.mxu0
  %v1350 = vadd.f32 %v80, %v1349
  %1351 = vmatmul.bf16.gmra.mxu0 %v1308
  %v1352 = vpop.f32.mrf.mxu0
  %v1353 = vadd.f32 %v80, %v1352
  %v1354 = vpop.f32.mrf.mxu0
  %v1355 = vadd.f32 %v80, %v1354
  %1356 = vmatmul.bf16.gmra.mxu0 %v1311
  %v1357 = vpop.f32.mrf.mxu0
  %v1358 = vadd.f32 %v80, %v1357
  %v1359 = vpop.f32.mrf.mxu0
  %v1360 = vadd.f32 %v80, %v1359
  %1361 = vdwg.mxu0
  %1362 = vmatpush.bf16.msra.mxu0 0
  %1363 = vmatpush.bf16.msra.mxu0 0
  %1364 = vmatpush.bf16.msra.mxu0 0
  %1365 = vmatpush.bf16.msra.mxu0 0
  %1366 = vmatpush.bf16.msra.mxu0 %v155
  %1367 = vmatpush.bf16.msra.mxu0 %v153
  %1368 = vmatpush.bf16.msra.mxu0 %v151
  %1369 = vmatpush.bf16.msra.mxu0 %v149
  %1370 = vmatmul.bf16.gmra.mxu0 %v1290
  %v1371 = vpop.f32.mrf.mxu0
  %v1372 = vadd.f32 %v81, %v1371
  %v1373 = vpop.f32.mrf.mxu0
  %v1374 = vadd.f32 %v81, %v1373
  %1375 = vmatmul.bf16.gmra.mxu0 %v1293
  %v1376 = vpop.f32.mrf.mxu0
  %v1377 = vadd.f32 %v81, %v1376
  %v1378 = vpop.f32.mrf.mxu0
  %v1379 = vadd.f32 %v81, %v1378
  %1380 = vmatmul.bf16.gmra.mxu0 %v1296
  %v1381 = vpop.f32.mrf.mxu0
  %v1382 = vadd.f32 %v81, %v1381
  %v1383 = vpop.f32.mrf.mxu0
  %v1384 = vadd.f32 %v81, %v1383
  %1385 = vmatmul.bf16.gmra.mxu0 %v1299
  %v1386 = vpop.f32.mrf.mxu0
  %v1387 = vadd.f32 %v81, %v1386
  %v1388 = vpop.f32.mrf.mxu0
  %v1389 = vadd.f32 %v81, %v1388
  %1390 = vmatmul.bf16.gmra.mxu0 %v1302
  %v1391 = vpop.f32.mrf.mxu0
  %v1392 = vadd.f32 %v81, %v1391
  %v1393 = vpop.f32.mrf.mxu0
  %v1394 = vadd.f32 %v81, %v1393
  %1395 = vmatmul.bf16.gmra.mxu0 %v1305
  %v1396 = vpop.f32.mrf.mxu0
  %v1397 = vadd.f32 %v81, %v1396
  %v1398 = vpop.f32.mrf.mxu0
  %v1399 = vadd.f32 %v81, %v1398
  %1400 = vmatmul.bf16.gmra.mxu0 %v1308
  %v1401 = vpop.f32.mrf.mxu0
  %v1402 = vadd.f32 %v81, %v1401
  %v1403 = vpop.f32.mrf.mxu0
  %v1404 = vadd.f32 %v81, %v1403
  %1405 = vmatmul.bf16.gmra.mxu0 %v1311
  %v1406 = vpop.f32.mrf.mxu0
  %v1407 = vadd.f32 %v81, %v1406
  %v1408 = vpop.f32.mrf.mxu0
  %v1409 = vadd.f32 %v81, %v1408
  %1410 = vdwg.mxu0
  %v1411 = vmax.f32 %v1323, 0.0
  %v1412 = vmax.f32 %v1372, 0.0
  %v1413 = vmax.f32 %v1325, 0.0
  %v1414 = vmax.f32 %v1374, 0.0
  %v1415 = vmax.f32 %v1328, 0.0
  %v1416 = vmax.f32 %v1377, 0.0
  %v1417 = vmax.f32 %v1330, 0.0
  %v1418 = vmax.f32 %v1379, 0.0
  %v1419 = vmax.f32 %v1333, 0.0
  %v1420 = vmax.f32 %v1382, 0.0
  %v1421 = vmax.f32 %v1335, 0.0
  %v1422 = vmax.f32 %v1384, 0.0
  %v1423 = vmax.f32 %v1338, 0.0
  %v1424 = vmax.f32 %v1387, 0.0
  %v1425 = vmax.f32 %v1340, 0.0
  %v1426 = vmax.f32 %v1389, 0.0
  %v1427 = vmax.f32 %v1343, 0.0
  %v1428 = vmax.f32 %v1392, 0.0
  %v1429 = vmax.f32 %v1345, 0.0
  %v1430 = vmax.f32 %v1394, 0.0
  %v1431 = vmax.f32 %v1348, 0.0
  %v1432 = vmax.f32 %v1397, 0.0
  %v1433 = vmax.f32 %v1350, 0.0
  %v1434 = vmax.f32 %v1399, 0.0
  %v1435 = vmax.f32 %v1353, 0.0
  %v1436 = vmax.f32 %v1402, 0.0
  %v1437 = vmax.f32 %v1355, 0.0
  %v1438 = vmax.f32 %v1404, 0.0
  %v1439 = vmax.f32 %v1358, 0.0
  %v1440 = vmax.f32 %v1407, 0.0
  %v1441 = vmax.f32 %v1360, 0.0
  %v1442 = vmax.f32 %v1409, 0.0
  %v1443 = vpack.c.bf16 %v1413, %v1411
  %v1444 = vpack.c.bf16 %v1414, %v1412
  %v1445 = vpack.c.bf16 %v1417, %v1415
  %v1446 = vpack.c.bf16 %v1418, %v1416
  %v1447 = vpack.c.bf16 %v1421, %v1419
  %v1448 = vpack.c.bf16 %v1422, %v1420
  %v1449 = vpack.c.bf16 %v1425, %v1423
  %v1450 = vpack.c.bf16 %v1426, %v1424
  %v1451 = vpack.c.bf16 %v1429, %v1427
  %v1452 = vpack.c.bf16 %v1430, %v1428
  %v1453 = vpack.c.bf16 %v1433, %v1431
  %v1454 = vpack.c.bf16 %v1434, %v1432
  %v1455 = vpack.c.bf16 %v1437, %v1435
  %v1456 = vpack.c.bf16 %v1438, %v1436
  %v1457 = vpack.c.bf16 %v1441, %v1439
  %v1458 = vpack.c.bf16 %v1442, %v1440
  %1459 = vmatpush.bf16.msra.mxu0 %v409
  %1460 = vmatpush.bf16.msra.mxu0 %v408
  %1461 = vmatpush.bf16.msra.mxu0 %v407
  %1462 = vmatpush.bf16.msra.mxu0 %v406
  %1463 = vmatpush.bf16.msra.mxu0 %v405
  %1464 = vmatpush.bf16.msra.mxu0 %v404
  %1465 = vmatpush.bf16.msra.mxu0 %v403
  %1466 = vmatpush.bf16.msra.mxu0 %v402
  %1467 = vmatmul.bf16.gmra.mxu0 %v1443
  %v1468 = vpop.f32.mrf.mxu0
  %v1469 = vadd.f32 %v336, %v1468
  %v1470 = vpop.f32.mrf.mxu0
  %v1471 = vadd.f32 %v336, %v1470
  %1472 = vmatmul.bf16.gmra.mxu0 %v1445
  %v1473 = vpop.f32.mrf.mxu0
  %v1474 = vadd.f32 %v336, %v1473
  %v1475 = vpop.f32.mrf.mxu0
  %v1476 = vadd.f32 %v336, %v1475
  %1477 = vmatmul.bf16.gmra.mxu0 %v1447
  %v1478 = vpop.f32.mrf.mxu0
  %v1479 = vadd.f32 %v336, %v1478
  %v1480 = vpop.f32.mrf.mxu0
  %v1481 = vadd.f32 %v336, %v1480
  %1482 = vmatmul.bf16.gmra.mxu0 %v1449
  %v1483 = vpop.f32.mrf.mxu0
  %v1484 = vadd.f32 %v336, %v1483
  %v1485 = vpop.f32.mrf.mxu0
  %v1486 = vadd.f32 %v336, %v1485
  %1487 = vmatmul.bf16.gmra.mxu0 %v1451
  %v1488 = vpop.f32.mrf.mxu0
  %v1489 = vadd.f32 %v336, %v1488
  %v1490 = vpop.f32.mrf.mxu0
  %v1491 = vadd.f32 %v336, %v1490
  %1492 = vmatmul.bf16.gmra.mxu0 %v1453
  %v1493 = vpop.f32.mrf.mxu0
  %v1494 = vadd.f32 %v336, %v1493
  %v1495 = vpop.f32.mrf.mxu0
  %v1496 = vadd.f32 %v336, %v1495
  %1497 = vmatmul.bf16.gmra.mxu0 %v1455
  %v1498 = vpop.f32.mrf.mxu0
  %v1499 = vadd.f32 %v336, %v1498
  %v1500 = vpop.f32.mrf.mxu0
  %v1501 = vadd.f32 %v336, %v1500
  %1502 = vmatmul.bf16.gmra.mxu0 %v1457
  %v1503 = vpop.f32.mrf.mxu0
  %v1504 = vadd.f32 %v336, %v1503
  %v1505 = vpop.f32.mrf.mxu0
  %v1506 = vadd.f32 %v336, %v1505
  %1507 = vdwg.mxu0
  %1508 = vmatpush.bf16.msra.mxu0 %v417
  %1509 = vmatpush.bf16.msra.mxu0 %v416
  %1510 = vmatpush.bf16.msra.mxu0 %v415
  %1511 = vmatpush.bf16.msra.mxu0 %v414
  %1512 = vmatpush.bf16.msra.mxu0 %v413
  %1513 = vmatpush.bf16.msra.mxu0 %v412
  %1514 = vmatpush.bf16.msra.mxu0 %v411
  %1515 = vmatpush.bf16.msra.mxu0 %v410
  %1516 = vmatmul.bf16.gmra.mxu0 %v1444
  %v1517 = vpop.f32.mrf.mxu0
  %v1518 = vadd.f32 %v1469, %v1517
  %v1519 = vpop.f32.mrf.mxu0
  %v1520 = vadd.f32 %v1471, %v1519
  %1521 = vmatmul.bf16.gmra.mxu0 %v1446
  %v1522 = vpop.f32.mrf.mxu0
  %v1523 = vadd.f32 %v1474, %v1522
  %v1524 = vpop.f32.mrf.mxu0
  %v1525 = vadd.f32 %v1476, %v1524
  %1526 = vmatmul.bf16.gmra.mxu0 %v1448
  %v1527 = vpop.f32.mrf.mxu0
  %v1528 = vadd.f32 %v1479, %v1527
  %v1529 = vpop.f32.mrf.mxu0
  %v1530 = vadd.f32 %v1481, %v1529
  %1531 = vmatmul.bf16.gmra.mxu0 %v1450
  %v1532 = vpop.f32.mrf.mxu0
  %v1533 = vadd.f32 %v1484, %v1532
  %v1534 = vpop.f32.mrf.mxu0
  %v1535 = vadd.f32 %v1486, %v1534
  %1536 = vmatmul.bf16.gmra.mxu0 %v1452
  %v1537 = vpop.f32.mrf.mxu0
  %v1538 = vadd.f32 %v1489, %v1537
  %v1539 = vpop.f32.mrf.mxu0
  %v1540 = vadd.f32 %v1491, %v1539
  %1541 = vmatmul.bf16.gmra.mxu0 %v1454
  %v1542 = vpop.f32.mrf.mxu0
  %v1543 = vadd.f32 %v1494, %v1542
  %v1544 = vpop.f32.mrf.mxu0
  %v1545 = vadd.f32 %v1496, %v1544
  %1546 = vmatmul.bf16.gmra.mxu0 %v1456
  %v1547 = vpop.f32.mrf.mxu0
  %v1548 = vadd.f32 %v1499, %v1547
  %v1549 = vpop.f32.mrf.mxu0
  %v1550 = vadd.f32 %v1501, %v1549
  %1551 = vmatmul.bf16.gmra.mxu0 %v1458
  %v1552 = vpop.f32.mrf.mxu0
  %v1553 = vadd.f32 %v1504, %v1552
  %v1554 = vpop.f32.mrf.mxu0
  %v1555 = vadd.f32 %v1506, %v1554
  %1556 = vdwg.mxu0
  %s1557 = scalar_lea.vmem %s5, 384
  %1558 = vst.msk [vmem:[%s1557] sm:$0xff] %vm164, %v1518
  %1559 = vst.msk [vmem:[%s1557 + $0x8] sm:$0xff] %vm164, %v1520
  %1560 = vst.msk [vmem:[%s1557 + $0x10] sm:$0xff] %vm164, %v1523
  %1561 = vst.msk [vmem:[%s1557 + $0x18] sm:$0xff] %vm164, %v1525
  %1562 = vst.msk [vmem:[%s1557 + $0x20] sm:$0xff] %vm164, %v1528
  %1563 = vst.msk [vmem:[%s1557 + $0x28] sm:$0xff] %vm164, %v1530
  %1564 = vst.msk [vmem:[%s1557 + $0x30] sm:$0xff] %vm164, %v1533
  %1565 = vst.msk [vmem:[%s1557 + $0x38] sm:$0xff] %vm164, %v1535
  %1566 = vst.msk [vmem:[%s1557 + $0x40] sm:$0xff] %vm164, %v1538
  %1567 = vst.msk [vmem:[%s1557 + $0x48] sm:$0xff] %vm164, %v1540
  %1568 = vst.msk [vmem:[%s1557 + $0x50] sm:$0xff] %vm164, %v1543
  %1569 = vst.msk [vmem:[%s1557 + $0x58] sm:$0xff] %vm164, %v1545
  %1570 = vst.msk [vmem:[%s1557 + $0x60] sm:$0xff] %vm164, %v1548
  %1571 = vst.msk [vmem:[%s1557 + $0x68] sm:$0xff] %vm164, %v1550
  %1572 = vst.msk [vmem:[%s1557 + $0x70] sm:$0xff] %vm164, %v1553
  %1573 = vst.msk [vmem:[%s1557 + $0x78] sm:$0xff] %vm164, %v1555
  // Predicated region
  $region22: #{tpu_custom_call.1} parent=0 // pred_check
    _
  $region23: #{tpu_custom_call.1} parent=0 // pred_check_branch
    %1575 = sbr.rel (0) target = $region25
  $region24: #{tpu_custom_call.1} parent=0 // pred_region
    _
  $region25: #{tpu_custom_call.1} parent=0 // pred_fallthru
    _
  // Predicated region
  $region26: #{tpu_custom_call.1} parent=0 // pred_check
    _
  $region27: #{tpu_custom_call.1} parent=0 // pred_check_branch
    %1577 = sbr.rel (0) target = $region29
  $region28: #{tpu_custom_call.1} parent=0 // pred_region
    _
  $region29: #{tpu_custom_call.1} parent=0 // pred_fallthru
    _

</llo_original>
